<compile_context>
chip_gen: v7x
topology: tpu7x:2x2x1
jax: 0.10.0
libtpu: 0.0.40
codegen_flags: <defaults>
</compile_context>

<pallas_src>
import jax
import jax.numpy as jnp
from jax.experimental import pallas as pl
from jax.experimental.pallas import tpu as pltpu

TIME_DIM = 1024
FREQ_DIM = 256
CAT_DIM = TIME_DIM + FREQ_DIM   # 1280
OUT_DIM = 40                    # fc01: Linear(1024 + 256, 40)
OUT_PAD = 128                   # lane-dense padded fc01 width


def _round_up(x, m):
    return (x + m - 1) // m * m


def _tpu_generation():
    """Best-effort TPU generation detection; conservative fallback."""
    try:
        kind = jax.devices()[0].device_kind.lower()
    except Exception:  # pragma: no cover - detection is best-effort
        return "unknown"
    if "v5" in kind:
        return "v5e"
    if "v6" in kind:
        return "v6e"
    if "v7" in kind:
        return "v7x"
    return "unknown"


# --------------------------------------------------------------------------
# Kernels
# --------------------------------------------------------------------------
def _encoder_kernel(x_ref, w_ref, b_ref, enc_ref, acc_ref):
    """Fused time+freq projection, K-tiled.

    x_ref:   (tm, tk)  bf16 input tile
    w_ref:   (tk, tn)  fused wt|wf weight tile (bf16), tn = 1280 or 640
    b_ref:   (1, tn)   fused bt|bf bias (f32)
    enc_ref: (tm, tn)  lastrep == encoded output slab (f32)
    acc_ref: (tm, tn)  f32 VMEM accumulator scratch
    """
    k = pl.program_id(2)

    @pl.when(k == 0)
    def _():
        acc_ref[...] = jnp.zeros_like(acc_ref)

    # Single fused MXU pass for both encoder projections (bf16 in, f32 acc).
    acc_ref[...] += jnp.dot(
        x_ref[...], w_ref[...], preferred_element_type=jnp.float32
    )

    @pl.when(k == pl.num_programs(2) - 1)
    def _():
        # Bias added once (not per K-step).
        enc_ref[...] = acc_ref[...] + b_ref[...]


def _fc01_kernel(enc_ref, w01_ref, b01_ref, out_ref):
    """fc01: (tm, 1280) @ (1280, 128) in bf16 on the MXU, f32 accumulate."""
    out_ref[...] = (
        jnp.dot(
            enc_ref[...].astype(jnp.bfloat16),
            w01_ref[...],
            preferred_element_type=jnp.float32,
        )
        + b01_ref[...]
    )


# --------------------------------------------------------------------------
# One-time parameter preparation (hoisted out of the per-call path)
# --------------------------------------------------------------------------
def prepare_params(params, d_in):
    """Fuse/cast/pad the weights ONCE so per-call weight traffic is zero."""
    gen = _tpu_generation()

    # Generation-aware tiling / VMEM budget.
    tk_max = 4096 if gen in ("v5e", "v6e") else 2048
    tm_cap = 256 if gen in ("v6e", "v7x") else 128
    vmem_limit = (64 if gen in ("v5e", "v6e") else 32) * 1024 * 1024

    # Minimal-zero K padding: d_pad is the smallest multiple-of-128 tiling
    # with tk <= tk_max (avoids streaming up to ~2x zero weight bytes).
    d128 = _round_up(d_in, 128)
    nk = -(-d128 // tk_max)
    tk = _round_up(-(-d128 // nk), 128)
    d_pad = nk * tk

    # Fuse the two encoder projections: wt|wf -> (d_pad, 1280) bf16.
    w_enc = jnp.concatenate([params["wt"], params["wf"]], axis=1)
    w_enc_p = (
        jnp.zeros((d_pad, CAT_DIM), jnp.bfloat16)
        .at[:d_in, :]
        .set(w_enc.astype(jnp.bfloat16))
    )
    b_enc = jnp.concatenate([params["bt"], params["bf"]], axis=1).astype(
        jnp.float32
    )

    # fc01 padded to a lane-dense 128-wide output, stored bf16.
    w01 = (
        jnp.zeros((CAT_DIM, OUT_PAD), jnp.bfloat16)
        .at[:, :OUT_DIM]
        .set(params["w01"].astype(jnp.bfloat16))
    )
    b01 = (
        jnp.zeros((1, OUT_PAD), jnp.float32)
        .at[:, :OUT_DIM]
        .set(params["b01"].astype(jnp.float32))
    )

    cfg = dict(gen=gen, tk=tk, d_pad=d_pad, tm_cap=tm_cap,
               vmem_limit=vmem_limit)
    return dict(d_in=d_in, cfg=cfg, w_enc=w_enc_p, b_enc=b_enc,
                w01=w01, b01=b01)


# --------------------------------------------------------------------------
# Forward pass
# --------------------------------------------------------------------------
def timefreq_encoder(x, prepared):
    """Runs the TimeFreqEncoder forward pass.

    Args:
      x: [B, C, L] float32 input.
      prepared: output of prepare_params().

    Returns:
      (lastrep, encoded, scores) matching the PyTorch module's outputs.
    """
    b, c, l = x.shape
    d_in = c * l
    assert d_in == prepared["d_in"], "prepare_params was built for another d_in"

    cfg = prepared["cfg"]
    tk, d_pad, tm_cap, gen = cfg["tk"], cfg["d_pad"], cfg["tm_cap"], cfg["gen"]

    # Batch tiling (second-to-minor dim must be a multiple of 8).
    b_pad = _round_up(max(b, 1), 8)
    if b_pad <= tm_cap:
        tm = b_pad
    else:
        tm = tm_cap
        b_pad = _round_up(b_pad, tm)

    nm = b_pad // tm
    nk = d_pad // tk
    # On v7x with a single batch tile, split CAT_DIM across the two
    # TensorCores so each streams half the fused weight concurrently.
    nn = 2 if (gen == "v7x" and nm == 1) else 1
    tn = CAT_DIM // nn

    # Per-call input prep only: bf16 cast + zero pad (exact math).
    x_flat = x.reshape(b, d_in).astype(jnp.bfloat16)
    x_p = jnp.zeros((b_pad, d_pad), jnp.bfloat16).at[:b, :d_in].set(x_flat)

    enc_p = pl.pallas_call(
        _encoder_kernel,
        out_shape=jax.ShapeDtypeStruct((b_pad, CAT_DIM), jnp.float32),
        grid_spec=pltpu.PrefetchScalarGridSpec(
            num_scalar_prefetch=0,
            grid=(nn, nm, nk),            # (N split, batch tiles, K reduction)
            in_specs=[
                pl.BlockSpec((tm, tk), lambda n, i, k: (i, k)),   # x (bf16)
                pl.BlockSpec((tk, tn), lambda n, i, k: (k, n)),   # fused W
                pl.BlockSpec((1, tn), lambda n, i, k: (0, n)),    # fused bias
            ],
            out_specs=pl.BlockSpec((tm, tn), lambda n, i, k: (i, n)),
            scratch_shapes=[pltpu.VMEM((tm, tn), jnp.float32)],
        ),
        compiler_params=pltpu.CompilerParams(
            dimension_semantics=("parallel", "parallel", "arbitrary"),
            vmem_limit_bytes=cfg["vmem_limit"],
        ),
    )(x_p, prepared["w_enc"], prepared["b_enc"])

    # Tiny fc01 epilogue kernel (negligible FLOPs / bytes).
    scores_p = pl.pallas_call(
        _fc01_kernel,
        out_shape=jax.ShapeDtypeStruct((b_pad, OUT_PAD), jnp.float32),
        grid_spec=pltpu.PrefetchScalarGridSpec(
            num_scalar_prefetch=0,
            grid=(nm,),
            in_specs=[
                pl.BlockSpec((tm, CAT_DIM), lambda i: (i, 0)),     # enc
                pl.BlockSpec((CAT_DIM, OUT_PAD), lambda i: (0, 0)),  # w01
                pl.BlockSpec((1, OUT_PAD), lambda i: (0, 0)),        # b01
            ],
            out_specs=pl.BlockSpec((tm, OUT_PAD), lambda i: (i, 0)),
        ),
        compiler_params=pltpu.CompilerParams(
            dimension_semantics=("parallel",),
        ),
    )(enc_p, prepared["w01"], prepared["b01"])

    encoded = enc_p[:b]
    scores = scores_p[:b, :OUT_DIM]
    lastrep = encoded
    return lastrep, encoded, scores


def init_params(key, d_in):
    """Deterministic synthetic parameter init (shapes from the module)."""
    k1, k2, k3, k4, k5, k6 = jax.random.split(key, 6)
    scale_t = 1.0 / jnp.sqrt(jnp.float32(d_in))
    scale_f = 1.0 / jnp.sqrt(jnp.float32(d_in))
    scale_o = 1.0 / jnp.sqrt(jnp.float32(CAT_DIM))
    return {
        # synthetic pretrained_model_time: d_in -> 1024
        "wt": jax.random.normal(k1, (d_in, TIME_DIM), jnp.float32) * scale_t,
        "bt": jax.random.normal(k2, (1, TIME_DIM), jnp.float32) * scale_t,
        # synthetic pretrained_model_freq: d_in -> 256
        "wf": jax.random.normal(k3, (d_in, FREQ_DIM), jnp.float32) * scale_f,
        "bf": jax.random.normal(k4, (1, FREQ_DIM), jnp.float32) * scale_f,
        # fc01: Linear(1280, 40), stored as (in, out)
        "w01": jax.random.normal(k5, (CAT_DIM, OUT_DIM), jnp.float32) * scale_o,
        "b01": jax.random.normal(k6, (1, OUT_DIM), jnp.float32) * scale_o,
    }


if __name__ == "__main__":
    key = jax.random.PRNGKey(0)
    k_x, k_p = jax.random.split(key)

    B, C, L = 2, 4, 128  # small shapes; d_in = 512
    x = jax.random.normal(k_x, (B, C, L), jnp.float32)
    params = init_params(k_p, C * L)

    # One-time weight fusion / padding / bf16 cast (hoisted out of the call).
    prepared = prepare_params(params, C * L)

    lastrep, encoded, scores = timefreq_encoder(x, prepared)
    jax.block_until_ready((lastrep, encoded, scores))

    # sanity: reference in plain f32 JAX
    x_flat = x.reshape(B, -1)
    tf_ref = x_flat @ params["wt"] + params["bt"]
    ff_ref = x_flat @ params["wf"] + params["bf"]
    enc_ref = jnp.concatenate([tf_ref, ff_ref], axis=1)
    scores_ref = enc_ref @ params["w01"] + params["b01"]

    assert lastrep.shape == (B, CAT_DIM)
    assert encoded.shape == (B, CAT_DIM)
    assert scores.shape == (B, OUT_DIM)
    # Kernel runs the projections (activations + weights) and fc01 in bf16 on
    # the MXU with f32 accumulation, so compare against the f32 reference
    # with a loose tolerance.
    assert jnp.allclose(encoded, enc_ref, atol=5e-2, rtol=5e-2)
    assert jnp.allclose(scores, scores_ref, atol=5e-2, rtol=5e-2)

    print("KERNEL_OK")
</pallas_src>

<mosaic_0001>
module attributes {stable_mosaic.version = 11 : i64} {
  func.func @_encoder_kernel(%arg0: i32, %arg1: i32, %arg2: i32, %arg3: memref<8x512xbf16, #tpu.memory_space<vmem>>, %arg4: memref<512x1280xbf16, #tpu.memory_space<vmem>>, %arg5: memref<1x1280xf32, #tpu.memory_space<vmem>>, %arg6: memref<8x1280xf32, #tpu.memory_space<vmem>>, %arg7: memref<8x1280xf32, #tpu.memory_space<vmem>>) attributes {dimension_semantics = [#tpu.dimension_semantics<parallel>, #tpu.dimension_semantics<parallel>, #tpu.dimension_semantics<arbitrary>], iteration_bounds = array<i64: 1, 1, 1>, scalar_prefetch = 0 : i64, scratch_operands = 1 : i64, tpu.core_type = #tpu.core_type<tc>, window_params = [{transform_indices = @transform_0, window_bounds = array<i64: 8, 512>}, {transform_indices = @transform_1, window_bounds = array<i64: 512, 1280>}, {transform_indices = @transform_2, window_bounds = array<i64: 1, 1280>}, {transform_indices = @transform_3, window_bounds = array<i64: 8, 1280>}]} {
    %c0_i32 = arith.constant 0 : i32
    %0 = arith.cmpi eq, %arg2, %c0_i32 : i32
    %1 = arith.extui %0 : i1 to i32
    %c0_i32_0 = arith.constant 0 : i32
    %2 = arith.cmpi ne, %1, %c0_i32_0 : i32
    scf.if %2 {
      %cst_10 = arith.constant 0.000000e+00 : f32
      %12 = vector.broadcast %cst_10 : f32 to vector<8x1280xf32>
      %c0_11 = arith.constant 0 : index
      %c0_12 = arith.constant 0 : index
      %13 = vector.load %arg7[%c0_11, %c0_12] : memref<8x1280xf32, #tpu.memory_space<vmem>>, vector<8x1280xf32>
      tpu.vector_store %arg7[%c0_11, %c0_12], %12 {strides = array<i32>} : memref<8x1280xf32, #tpu.memory_space<vmem>>, vector<8x1280xf32>,
    } else {
    }
    %c0 = arith.constant 0 : index
    %c0_1 = arith.constant 0 : index
    %3 = vector.load %arg7[%c0, %c0_1] : memref<8x1280xf32, #tpu.memory_space<vmem>>, vector<8x1280xf32>
    %c0_2 = arith.constant 0 : index
    %c0_3 = arith.constant 0 : index
    %4 = vector.load %arg3[%c0_2, %c0_3] : memref<8x512xbf16, #tpu.memory_space<vmem>>, vector<8x512xbf16>
    %c0_4 = arith.constant 0 : index
    %c0_5 = arith.constant 0 : index
    %5 = vector.load %arg4[%c0_4, %c0_5] : memref<512x1280xbf16, #tpu.memory_space<vmem>>, vector<512x1280xbf16>
    %cst = arith.constant dense<0.000000e+00> : vector<8x1280xf32>
    %6 = tpu.matmul %4, %5, %cst {dimension_numbers = #tpu.dot_dimension_numbers<[1], [0], [0], [1], [0, 0, 1, 1], [], []>} : vector<8x512xbf16>, vector<512x1280xbf16>, vector<8x1280xf32> -> vector<8x1280xf32>
    %7 = arith.addf %3, %6 : vector<8x1280xf32>
    %c0_6 = arith.constant 0 : index
    %c0_7 = arith.constant 0 : index
    %8 = vector.load %arg7[%c0_6, %c0_7] : memref<8x1280xf32, #tpu.memory_space<vmem>>, vector<8x1280xf32>
    tpu.vector_store %arg7[%c0_6, %c0_7], %7 {strides = array<i32>} : memref<8x1280xf32, #tpu.memory_space<vmem>>, vector<8x1280xf32>,
    %c0_i32_8 = arith.constant 0 : i32
    %9 = arith.cmpi eq, %arg2, %c0_i32_8 : i32
    %10 = arith.extui %9 : i1 to i32
    %c0_i32_9 = arith.constant 0 : i32
    %11 = arith.cmpi ne, %10, %c0_i32_9 : i32
    scf.if %11 {
      %c0_10 = arith.constant 0 : index
      %c0_11 = arith.constant 0 : index
      %12 = vector.load %arg7[%c0_10, %c0_11] : memref<8x1280xf32, #tpu.memory_space<vmem>>, vector<8x1280xf32>
      %c0_12 = arith.constant 0 : index
      %c0_13 = arith.constant 0 : index
      %13 = vector.load %arg5[%c0_12, %c0_13] : memref<1x1280xf32, #tpu.memory_space<vmem>>, vector<1x1280xf32>
      %14 = vector.broadcast %13 : vector<1x1280xf32> to vector<8x1280xf32>
      %15 = arith.addf %12, %14 : vector<8x1280xf32>
      %c0_14 = arith.constant 0 : index
      %c0_15 = arith.constant 0 : index
      %16 = vector.load %arg6[%c0_14, %c0_15] : memref<8x1280xf32, #tpu.memory_space<vmem>>, vector<8x1280xf32>
      tpu.vector_store %arg6[%c0_14, %c0_15], %15 {strides = array<i32>} : memref<8x1280xf32, #tpu.memory_space<vmem>>, vector<8x1280xf32>,
    } else {
    }
    return
  }
  func.func @transform_0(%arg0: i32, %arg1: i32, %arg2: i32) -> (i32, i32) {
    %c0_i32 = arith.constant 0 : i32
    return %arg1, %arg2 : i32, i32
  }
  func.func @transform_1(%arg0: i32, %arg1: i32, %arg2: i32) -> (i32, i32) {
    %c0_i32 = arith.constant 0 : i32
    return %arg2, %arg0 : i32, i32
  }
  func.func @transform_2(%arg0: i32, %arg1: i32, %arg2: i32) -> (i32, i32) {
    %c0_i32 = arith.constant 0 : i32
    %c0_i32_0 = arith.constant 0 : i32
    return %c0_i32, %arg0 : i32, i32
  }
  func.func @transform_3(%arg0: i32, %arg1: i32, %arg2: i32) -> (i32, i32) {
    %c0_i32 = arith.constant 0 : i32
    return %arg1, %arg0 : i32, i32
  }
}

</mosaic_0001>

<llo_original>
// kernel: tpu_custom_call.1
$region0: #{tpu_custom_call.1}
  #allocation0 [shape = 'u32[]', space=smem, size = 0x4, offset = 0x4, fixed_abs, tag = 'smem constant byte address 0x4 - core index']
  #allocation1 [shape = 'u32[144,128]{1,0:T(1,128)}', space=vmem, size = 0x12000, scoped, tag = 'internal scratch']
  #allocation2 [shape = 'f32[8,1280]{1,0:T(8,128)}', space=vmem, size = 0xa000, scoped, tag = 'scratch operand']
  %s0 = inlined_call_operand.hbm [shape: bf16[8,512], index: 0, kind: input, shape index: {}]
  %s1 = inlined_call_operand.hbm [shape: bf16[512,1280], index: 1, kind: input, shape index: {}]
  %s2 = inlined_call_operand.hbm [shape: f32[1,1280], index: 2, kind: input, shape index: {}]
  %s3 = inlined_call_operand.hbm [shape: f32[8,1280], index: 3, kind: output, shape index: {}]
  %s4 = sld [smem:[#allocation0]]
  $region42: #{tpu_custom_call.1} parent=0
    _
  %s6 = ssub.s32 1, %s4
  %s7 = scalar_select 0, %s6, %s4
  $region1: #{tpu_custom_call.1} parent=0
    #allocation3 [shape = 'u8[8192]{0}', space=vmem, size = 0x2000, scoped, tag = 'input window, operand 0, single buffered']
    #allocation4 [shape = 's32[1]{0}', space=sflag, size = 0x4, scoped, tag = 'scoped memory for tpu_custom_call.1']
    #allocation5 [shape = 's32[1]{0}', space=sflag, size = 0x4, scoped, tag = 'scoped memory for tpu_custom_call.1']
    #allocation6 [shape = 'u8[1310720]{0}', space=vmem, size = 0x140000, scoped, tag = 'input window, operand 1, single buffered']
    #allocation7 [shape = 's32[1]{0}', space=sflag, size = 0x4, scoped, tag = 'scoped memory for tpu_custom_call.1']
    #allocation8 [shape = 'u8[5120]{0}', space=vmem, size = 0x1400, scoped, tag = 'input window, operand 2, single buffered']
    #allocation9 [shape = 'u8[40960]{0}', space=vmem, size = 0xa000, scoped, tag = 'output window, operand 0, single buffered']
    %8 = vsyncpa [#allocation4], 0
    %9 = vsyncpa [#allocation7], 0
    %10 = vsyncpa [#allocation5], 0
    // Predicated region
    $region2: #{tpu_custom_call.1} parent=1 // pred_check
      _
    $region3: #{tpu_custom_call.1} parent=1 // pred_check_branch
      %12 = sbr.rel (0) target = $region5
    $region4: #{tpu_custom_call.1} parent=1 // pred_region
      %s14 = ssub.s32 256, 256
      %15 = vsyncadd [#allocation4], %s14
      %s17 = sshll.u32 [#allocation3], 4
      %s18 = int_to_ptr.vmem [resolvable:$true] %s17
      %20 = dma.hbm_to_vmem [thread:$0]  %s0, 256, %s18, [#allocation4]
    $region5: #{tpu_custom_call.1} parent=1 // pred_fallthru
      _
    // Predicated region
    $region6: #{tpu_custom_call.1} parent=1 // pred_check
      _
    $region7: #{tpu_custom_call.1} parent=1 // pred_check_branch
      %22 = sbr.rel (0) target = $region9
    $region8: #{tpu_custom_call.1} parent=1 // pred_region
      %s24 = ssub.s32 40960, 40960
      %25 = vsyncadd [#allocation7], %s24
      %s26 = sshll.u32 [#allocation6], 4
      %s27 = int_to_ptr.vmem [resolvable:$true] %s26
      %32 = dma.hbm_to_vmem [thread:$0]  %s1, 40960, %s27, [#allocation7], 640, 640, 40
    $region9: #{tpu_custom_call.1} parent=1 // pred_fallthru
      _
    // Predicated region
    $region10: #{tpu_custom_call.1} parent=1 // pred_check
      _
    $region11: #{tpu_custom_call.1} parent=1 // pred_check_branch
      %34 = sbr.rel (0) target = $region13
    $region12: #{tpu_custom_call.1} parent=1 // pred_region
      %s36 = ssub.s32 160, 160
      %37 = vsyncadd [#allocation7], %s36
      %s39 = sshll.u32 [#allocation8], 4
      %s40 = int_to_ptr.vmem [resolvable:$true] %s39
      %42 = dma.hbm_to_vmem [thread:$0]  %s2, 160, %s40, [#allocation7]
    $region13: #{tpu_custom_call.1} parent=1 // pred_fallthru
      _
    // Predicated region
    $region14: #{tpu_custom_call.1} parent=1 // pred_check
      _
    $region15: #{tpu_custom_call.1} parent=1 // pred_check_branch
      %44 = sbr.rel (0) target = $region17
    $region16: #{tpu_custom_call.1} parent=1 // pred_region
      %45 = dma.done [#allocation4], 256
    $region17: #{tpu_custom_call.1} parent=1 // pred_fallthru
      _
    // Predicated region
    $region18: #{tpu_custom_call.1} parent=1 // pred_check
      _
    $region19: #{tpu_custom_call.1} parent=1 // pred_check_branch
      %47 = sbr.rel (0) target = $region21
    $region20: #{tpu_custom_call.1} parent=1 // pred_region
      %48 = dma.done [#allocation7], 40960
    $region21: #{tpu_custom_call.1} parent=1 // pred_fallthru
      _
    // Predicated region
    $region22: #{tpu_custom_call.1} parent=1 // pred_check
      _
    $region23: #{tpu_custom_call.1} parent=1 // pred_check_branch
      %50 = sbr.rel (0) target = $region25
    $region24: #{tpu_custom_call.1} parent=1 // pred_region
      %51 = dma.done [#allocation7], 160
    $region25: #{tpu_custom_call.1} parent=1 // pred_fallthru
      _
    %p52 = scmp.eq.s32.totalorder 0, 0
    // Predicated region
    $region26: #{tpu_custom_call.1} parent=1 // pred_check
      %p53 = pneg %p52
    $region27: #{tpu_custom_call.1} parent=1 // pred_check_branch
      %55 = sbr.rel (%p53) target = $region29
    $region28: #{tpu_custom_call.1} parent=1 // pred_region
      %56 = vst [vmem:[#allocation2] sm:$0xff] 0.0
      %57 = vst [vmem:[#allocation2 + $0x8] sm:$0xff] 0.0
      %58 = vst [vmem:[#allocation2 + $0x10] sm:$0xff] 0.0
      %59 = vst [vmem:[#allocation2 + $0x18] sm:$0xff] 0.0
      %60 = vst [vmem:[#allocation2 + $0x20] sm:$0xff] 0.0
      %61 = vst [vmem:[#allocation2 + $0x28] sm:$0xff] 0.0
      %62 = vst [vmem:[#allocation2 + $0x30] sm:$0xff] 0.0
      %63 = vst [vmem:[#allocation2 + $0x38] sm:$0xff] 0.0
      %64 = vst [vmem:[#allocation2 + $0x40] sm:$0xff] 0.0
      %65 = vst [vmem:[#allocation2 + $0x48] sm:$0xff] 0.0
    $region29: #{tpu_custom_call.1} parent=1 // pred_fallthru
      _
    %v66 = vld [vmem:[#allocation2] sm:$0xff]
    %v67 = vld [vmem:[#allocation2 + $0x8] sm:$0xff]
    %v68 = vld [vmem:[#allocation2 + $0x10] sm:$0xff]
    %v69 = vld [vmem:[#allocation2 + $0x18] sm:$0xff]
    %v70 = vld [vmem:[#allocation2 + $0x20] sm:$0xff]
    %v71 = vld [vmem:[#allocation2 + $0x28] sm:$0xff]
    %v72 = vld [vmem:[#allocation2 + $0x30] sm:$0xff]
    %v73 = vld [vmem:[#allocation2 + $0x38] sm:$0xff]
    %v74 = vld [vmem:[#allocation2 + $0x40] sm:$0xff]
    %v75 = vld [vmem:[#allocation2 + $0x48] sm:$0xff]
    %v76 = vld [vmem:[#allocation3] sm:$0xff]
    %v77 = vld [vmem:[#allocation3 + $0x8] sm:$0xff]
    %v78 = vld [vmem:[#allocation6] sm:$0xff]
    %v79 = vld [vmem:[#allocation6 + $0x8] sm:$0xff]
    %v80 = vld [vmem:[#allocation6 + $0x10] sm:$0xff]
    %v81 = vld [vmem:[#allocation6 + $0x18] sm:$0xff]
    %v82 = vld [vmem:[#allocation6 + $0x20] sm:$0xff]
    %v83 = vld [vmem:[#allocation6 + $0x28] sm:$0xff]
    %v84 = vld [vmem:[#allocation6 + $0x30] sm:$0xff]
    %v85 = vld [vmem:[#allocation6 + $0x38] sm:$0xff]
    %v86 = vld [vmem:[#allocation6 + $0x40] sm:$0xff]
    %v87 = vld [vmem:[#allocation6 + $0x48] sm:$0xff]
    %v88 = vld [vmem:[#allocation6 + $0x50] sm:$0xff]
    %v89 = vld [vmem:[#allocation6 + $0x58] sm:$0xff]
    %v90 = vld [vmem:[#allocation6 + $0x60] sm:$0xff]
    %v91 = vld [vmem:[#allocation6 + $0x68] sm:$0xff]
    %v92 = vld [vmem:[#allocation6 + $0x70] sm:$0xff]
    %v93 = vld [vmem:[#allocation6 + $0x78] sm:$0xff]
    %v94 = vld [vmem:[#allocation6 + $0x80] sm:$0xff]
    %v95 = vld [vmem:[#allocation6 + $0x88] sm:$0xff]
    %v96 = vld [vmem:[#allocation6 + $0x90] sm:$0xff]
    %v97 = vld [vmem:[#allocation6 + $0x98] sm:$0xff]
    %v98 = vld [vmem:[#allocation6 + $0xa0] sm:$0xff]
    %v99 = vld [vmem:[#allocation6 + $0xa8] sm:$0xff]
    %v100 = vld [vmem:[#allocation6 + $0xb0] sm:$0xff]
    %v101 = vld [vmem:[#allocation6 + $0xb8] sm:$0xff]
    %v102 = vld [vmem:[#allocation6 + $0xc0] sm:$0xff]
    %v103 = vld [vmem:[#allocation6 + $0xc8] sm:$0xff]
    %v104 = vld [vmem:[#allocation6 + $0xd0] sm:$0xff]
    %v105 = vld [vmem:[#allocation6 + $0xd8] sm:$0xff]
    %v106 = vld [vmem:[#allocation6 + $0xe0] sm:$0xff]
    %v107 = vld [vmem:[#allocation6 + $0xe8] sm:$0xff]
    %v108 = vld [vmem:[#allocation6 + $0xf0] sm:$0xff]
    %v109 = vld [vmem:[#allocation6 + $0xf8] sm:$0xff]
    %v110 = vld [vmem:[#allocation6 + $0x100] sm:$0xff]
    %v111 = vld [vmem:[#allocation6 + $0x108] sm:$0xff]
    %v112 = vld [vmem:[#allocation6 + $0x110] sm:$0xff]
    %v113 = vld [vmem:[#allocation6 + $0x118] sm:$0xff]
    %v114 = vld [vmem:[#allocation6 + $0x120] sm:$0xff]
    %v115 = vld [vmem:[#allocation6 + $0x128] sm:$0xff]
    %v116 = vld [vmem:[#allocation6 + $0x130] sm:$0xff]
    %v117 = vld [vmem:[#allocation6 + $0x138] sm:$0xff]
    %v118 = vld [vmem:[#allocation6 + $0x140] sm:$0xff]
    %v119 = vld [vmem:[#allocation6 + $0x148] sm:$0xff]
    %v120 = vld [vmem:[#allocation6 + $0x150] sm:$0xff]
    %v121 = vld [vmem:[#allocation6 + $0x158] sm:$0xff]
    %v122 = vld [vmem:[#allocation6 + $0x160] sm:$0xff]
    %v123 = vld [vmem:[#allocation6 + $0x168] sm:$0xff]
    %v124 = vld [vmem:[#allocation6 + $0x170] sm:$0xff]
    %v125 = vld [vmem:[#allocation6 + $0x178] sm:$0xff]
    %v126 = vld [vmem:[#allocation6 + $0x180] sm:$0xff]
    %v127 = vld [vmem:[#allocation6 + $0x188] sm:$0xff]
    %v128 = vld [vmem:[#allocation6 + $0x190] sm:$0xff]
    %v129 = vld [vmem:[#allocation6 + $0x198] sm:$0xff]
    %v130 = vld [vmem:[#allocation6 + $0x1a0] sm:$0xff]
    %v131 = vld [vmem:[#allocation6 + $0x1a8] sm:$0xff]
    %v132 = vld [vmem:[#allocation6 + $0x1b0] sm:$0xff]
    %v133 = vld [vmem:[#allocation6 + $0x1b8] sm:$0xff]
    %v134 = vld [vmem:[#allocation6 + $0x1c0] sm:$0xff]
    %v135 = vld [vmem:[#allocation6 + $0x1c8] sm:$0xff]
    %v136 = vld [vmem:[#allocation6 + $0x1d0] sm:$0xff]
    %v137 = vld [vmem:[#allocation6 + $0x1d8] sm:$0xff]
    %v138 = vld [vmem:[#allocation6 + $0x1e0] sm:$0xff]
    %v139 = vld [vmem:[#allocation6 + $0x1e8] sm:$0xff]
    %v140 = vld [vmem:[#allocation6 + $0x1f0] sm:$0xff]
    %v141 = vld [vmem:[#allocation6 + $0x1f8] sm:$0xff]
    %v142 = vld [vmem:[#allocation6 + $0x200] sm:$0xff]
    %v143 = vld [vmem:[#allocation6 + $0x208] sm:$0xff]
    %v144 = vld [vmem:[#allocation6 + $0x210] sm:$0xff]
    %v145 = vld [vmem:[#allocation6 + $0x218] sm:$0xff]
    %v146 = vld [vmem:[#allocation6 + $0x220] sm:$0xff]
    %v147 = vld [vmem:[#allocation6 + $0x228] sm:$0xff]
    %v148 = vld [vmem:[#allocation6 + $0x230] sm:$0xff]
    %v149 = vld [vmem:[#allocation6 + $0x238] sm:$0xff]
    %v150 = vld [vmem:[#allocation6 + $0x240] sm:$0xff]
    %v151 = vld [vmem:[#allocation6 + $0x248] sm:$0xff]
    %v152 = vld [vmem:[#allocation6 + $0x250] sm:$0xff]
    %v153 = vld [vmem:[#allocation6 + $0x258] sm:$0xff]
    %v154 = vld [vmem:[#allocation6 + $0x260] sm:$0xff]
    %v155 = vld [vmem:[#allocation6 + $0x268] sm:$0xff]
    %v156 = vld [vmem:[#allocation6 + $0x270] sm:$0xff]
    %v157 = vld [vmem:[#allocation6 + $0x278] sm:$0xff]
    %v158 = vld [vmem:[#allocation6 + $0x280] sm:$0xff]
    %v159 = vld [vmem:[#allocation6 + $0x288] sm:$0xff]
    %v160 = vld [vmem:[#allocation6 + $0x290] sm:$0xff]
    %v161 = vld [vmem:[#allocation6 + $0x298] sm:$0xff]
    %v162 = vld [vmem:[#allocation6 + $0x2a0] sm:$0xff]
    %v163 = vld [vmem:[#allocation6 + $0x2a8] sm:$0xff]
    %v164 = vld [vmem:[#allocation6 + $0x2b0] sm:$0xff]
    %v165 = vld [vmem:[#allocation6 + $0x2b8] sm:$0xff]
    %v166 = vld [vmem:[#allocation6 + $0x2c0] sm:$0xff]
    %v167 = vld [vmem:[#allocation6 + $0x2c8] sm:$0xff]
    %v168 = vld [vmem:[#allocation6 + $0x2d0] sm:$0xff]
    %v169 = vld [vmem:[#allocation6 + $0x2d8] sm:$0xff]
    %v170 = vld [vmem:[#allocation6 + $0x2e0] sm:$0xff]
    %v171 = vld [vmem:[#allocation6 + $0x2e8] sm:$0xff]
    %v172 = vld [vmem:[#allocation6 + $0x2f0] sm:$0xff]
    %v173 = vld [vmem:[#allocation6 + $0x2f8] sm:$0xff]
    %v174 = vld [vmem:[#allocation6 + $0x300] sm:$0xff]
    %v175 = vld [vmem:[#allocation6 + $0x308] sm:$0xff]
    %v176 = vld [vmem:[#allocation6 + $0x310] sm:$0xff]
    %v177 = vld [vmem:[#allocation6 + $0x318] sm:$0xff]
    %v178 = vld [vmem:[#allocation6 + $0x320] sm:$0xff]
    %v179 = vld [vmem:[#allocation6 + $0x328] sm:$0xff]
    %v180 = vld [vmem:[#allocation6 + $0x330] sm:$0xff]
    %v181 = vld [vmem:[#allocation6 + $0x338] sm:$0xff]
    %v182 = vld [vmem:[#allocation6 + $0x340] sm:$0xff]
    %v183 = vld [vmem:[#allocation6 + $0x348] sm:$0xff]
    %v184 = vld [vmem:[#allocation6 + $0x350] sm:$0xff]
    %v185 = vld [vmem:[#allocation6 + $0x358] sm:$0xff]
    %v186 = vld [vmem:[#allocation6 + $0x360] sm:$0xff]
    %v187 = vld [vmem:[#allocation6 + $0x368] sm:$0xff]
    %v188 = vld [vmem:[#allocation6 + $0x370] sm:$0xff]
    %v189 = vld [vmem:[#allocation6 + $0x378] sm:$0xff]
    %v190 = vld [vmem:[#allocation6 + $0x380] sm:$0xff]
    %v191 = vld [vmem:[#allocation6 + $0x388] sm:$0xff]
    %v192 = vld [vmem:[#allocation6 + $0x390] sm:$0xff]
    %v193 = vld [vmem:[#allocation6 + $0x398] sm:$0xff]
    %v194 = vld [vmem:[#allocation6 + $0x3a0] sm:$0xff]
    %v195 = vld [vmem:[#allocation6 + $0x3a8] sm:$0xff]
    %v196 = vld [vmem:[#allocation6 + $0x3b0] sm:$0xff]
    %v197 = vld [vmem:[#allocation6 + $0x3b8] sm:$0xff]
    %v198 = vld [vmem:[#allocation6 + $0x3c0] sm:$0xff]
    %v199 = vld [vmem:[#allocation6 + $0x3c8] sm:$0xff]
    %v200 = vld [vmem:[#allocation6 + $0x3d0] sm:$0xff]
    %v201 = vld [vmem:[#allocation6 + $0x3d8] sm:$0xff]
    %v202 = vld [vmem:[#allocation6 + $0x3e0] sm:$0xff]
    %v203 = vld [vmem:[#allocation6 + $0x3e8] sm:$0xff]
    %v204 = vld [vmem:[#allocation6 + $0x3f0] sm:$0xff]
    %v205 = vld [vmem:[#allocation6 + $0x3f8] sm:$0xff]
    %v206 = vld [vmem:[#allocation6 + $0x400] sm:$0xff]
    %v207 = vld [vmem:[#allocation6 + $0x408] sm:$0xff]
    %v208 = vld [vmem:[#allocation6 + $0x410] sm:$0xff]
    %v209 = vld [vmem:[#allocation6 + $0x418] sm:$0xff]
    %v210 = vld [vmem:[#allocation6 + $0x420] sm:$0xff]
    %v211 = vld [vmem:[#allocation6 + $0x428] sm:$0xff]
    %v212 = vld [vmem:[#allocation6 + $0x430] sm:$0xff]
    %v213 = vld [vmem:[#allocation6 + $0x438] sm:$0xff]
    %v214 = vld [vmem:[#allocation6 + $0x440] sm:$0xff]
    %v215 = vld [vmem:[#allocation6 + $0x448] sm:$0xff]
    %v216 = vld [vmem:[#allocation6 + $0x450] sm:$0xff]
    %v217 = vld [vmem:[#allocation6 + $0x458] sm:$0xff]
    %v218 = vld [vmem:[#allocation6 + $0x460] sm:$0xff]
    %v219 = vld [vmem:[#allocation6 + $0x468] sm:$0xff]
    %v220 = vld [vmem:[#allocation6 + $0x470] sm:$0xff]
    %v221 = vld [vmem:[#allocation6 + $0x478] sm:$0xff]
    %v222 = vld [vmem:[#allocation6 + $0x480] sm:$0xff]
    %v223 = vld [vmem:[#allocation6 + $0x488] sm:$0xff]
    %v224 = vld [vmem:[#allocation6 + $0x490] sm:$0xff]
    %v225 = vld [vmem:[#allocation6 + $0x498] sm:$0xff]
    %v226 = vld [vmem:[#allocation6 + $0x4a0] sm:$0xff]
    %v227 = vld [vmem:[#allocation6 + $0x4a8] sm:$0xff]
    %v228 = vld [vmem:[#allocation6 + $0x4b0] sm:$0xff]
    %v229 = vld [vmem:[#allocation6 + $0x4b8] sm:$0xff]
    %v230 = vld [vmem:[#allocation6 + $0x4c0] sm:$0xff]
    %v231 = vld [vmem:[#allocation6 + $0x4c8] sm:$0xff]
    %v232 = vld [vmem:[#allocation6 + $0x4d0] sm:$0xff]
    %v233 = vld [vmem:[#allocation6 + $0x4d8] sm:$0xff]
    %v234 = vld [vmem:[#allocation6 + $0x4e0] sm:$0xff]
    %v235 = vld [vmem:[#allocation6 + $0x4e8] sm:$0xff]
    %v236 = vld [vmem:[#allocation6 + $0x4f0] sm:$0xff]
    %v237 = vld [vmem:[#allocation6 + $0x4f8] sm:$0xff]
    %v238 = vld [vmem:[#allocation6 + $0x500] sm:$0xff]
    %v239 = vld [vmem:[#allocation6 + $0x508] sm:$0xff]
    %v240 = vld [vmem:[#allocation6 + $0x510] sm:$0xff]
    %v241 = vld [vmem:[#allocation6 + $0x518] sm:$0xff]
    %v242 = vld [vmem:[#allocation6 + $0x520] sm:$0xff]
    %v243 = vld [vmem:[#allocation6 + $0x528] sm:$0xff]
    %v244 = vld [vmem:[#allocation6 + $0x530] sm:$0xff]
    %v245 = vld [vmem:[#allocation6 + $0x538] sm:$0xff]
    %v246 = vld [vmem:[#allocation6 + $0x540] sm:$0xff]
    %v247 = vld [vmem:[#allocation6 + $0x548] sm:$0xff]
    %v248 = vld [vmem:[#allocation6 + $0x550] sm:$0xff]
    %v249 = vld [vmem:[#allocation6 + $0x558] sm:$0xff]
    %v250 = vld [vmem:[#allocation6 + $0x560] sm:$0xff]
    %v251 = vld [vmem:[#allocation6 + $0x568] sm:$0xff]
    %v252 = vld [vmem:[#allocation6 + $0x570] sm:$0xff]
    %v253 = vld [vmem:[#allocation6 + $0x578] sm:$0xff]
    %v254 = vld [vmem:[#allocation6 + $0x580] sm:$0xff]
    %v255 = vld [vmem:[#allocation6 + $0x588] sm:$0xff]
    %v256 = vld [vmem:[#allocation6 + $0x590] sm:$0xff]
    %v257 = vld [vmem:[#allocation6 + $0x598] sm:$0xff]
    %v258 = vld [vmem:[#allocation6 + $0x5a0] sm:$0xff]
    %v259 = vld [vmem:[#allocation6 + $0x5a8] sm:$0xff]
    %v260 = vld [vmem:[#allocation6 + $0x5b0] sm:$0xff]
    %v261 = vld [vmem:[#allocation6 + $0x5b8] sm:$0xff]
    %v262 = vld [vmem:[#allocation6 + $0x5c0] sm:$0xff]
    %v263 = vld [vmem:[#allocation6 + $0x5c8] sm:$0xff]
    %v264 = vld [vmem:[#allocation6 + $0x5d0] sm:$0xff]
    %v265 = vld [vmem:[#allocation6 + $0x5d8] sm:$0xff]
    %v266 = vld [vmem:[#allocation6 + $0x5e0] sm:$0xff]
    %v267 = vld [vmem:[#allocation6 + $0x5e8] sm:$0xff]
    %v268 = vld [vmem:[#allocation6 + $0x5f0] sm:$0xff]
    %v269 = vld [vmem:[#allocation6 + $0x5f8] sm:$0xff]
    %v270 = vld [vmem:[#allocation6 + $0x600] sm:$0xff]
    %v271 = vld [vmem:[#allocation6 + $0x608] sm:$0xff]
    %v272 = vld [vmem:[#allocation6 + $0x610] sm:$0xff]
    %v273 = vld [vmem:[#allocation6 + $0x618] sm:$0xff]
    %v274 = vld [vmem:[#allocation6 + $0x620] sm:$0xff]
    %v275 = vld [vmem:[#allocation6 + $0x628] sm:$0xff]
    %v276 = vld [vmem:[#allocation6 + $0x630] sm:$0xff]
    %v277 = vld [vmem:[#allocation6 + $0x638] sm:$0xff]
    %v278 = vld [vmem:[#allocation6 + $0x640] sm:$0xff]
    %v279 = vld [vmem:[#allocation6 + $0x648] sm:$0xff]
    %v280 = vld [vmem:[#allocation6 + $0x650] sm:$0xff]
    %v281 = vld [vmem:[#allocation6 + $0x658] sm:$0xff]
    %v282 = vld [vmem:[#allocation6 + $0x660] sm:$0xff]
    %v283 = vld [vmem:[#allocation6 + $0x668] sm:$0xff]
    %v284 = vld [vmem:[#allocation6 + $0x670] sm:$0xff]
    %v285 = vld [vmem:[#allocation6 + $0x678] sm:$0xff]
    %v286 = vld [vmem:[#allocation6 + $0x680] sm:$0xff]
    %v287 = vld [vmem:[#allocation6 + $0x688] sm:$0xff]
    %v288 = vld [vmem:[#allocation6 + $0x690] sm:$0xff]
    %v289 = vld [vmem:[#allocation6 + $0x698] sm:$0xff]
    %v290 = vld [vmem:[#allocation6 + $0x6a0] sm:$0xff]
    %v291 = vld [vmem:[#allocation6 + $0x6a8] sm:$0xff]
    %v292 = vld [vmem:[#allocation6 + $0x6b0] sm:$0xff]
    %v293 = vld [vmem:[#allocation6 + $0x6b8] sm:$0xff]
    %v294 = vld [vmem:[#allocation6 + $0x6c0] sm:$0xff]
    %v295 = vld [vmem:[#allocation6 + $0x6c8] sm:$0xff]
    %v296 = vld [vmem:[#allocation6 + $0x6d0] sm:$0xff]
    %v297 = vld [vmem:[#allocation6 + $0x6d8] sm:$0xff]
    %v298 = vld [vmem:[#allocation6 + $0x6e0] sm:$0xff]
    %v299 = vld [vmem:[#allocation6 + $0x6e8] sm:$0xff]
    %v300 = vld [vmem:[#allocation6 + $0x6f0] sm:$0xff]
    %v301 = vld [vmem:[#allocation6 + $0x6f8] sm:$0xff]
    %v302 = vld [vmem:[#allocation6 + $0x700] sm:$0xff]
    %v303 = vld [vmem:[#allocation6 + $0x708] sm:$0xff]
    %v304 = vld [vmem:[#allocation6 + $0x710] sm:$0xff]
    %v305 = vld [vmem:[#allocation6 + $0x718] sm:$0xff]
    %v306 = vld [vmem:[#allocation6 + $0x720] sm:$0xff]
    %v307 = vld [vmem:[#allocation6 + $0x728] sm:$0xff]
    %v308 = vld [vmem:[#allocation6 + $0x730] sm:$0xff]
    %v309 = vld [vmem:[#allocation6 + $0x738] sm:$0xff]
    %v310 = vld [vmem:[#allocation6 + $0x740] sm:$0xff]
    %v311 = vld [vmem:[#allocation6 + $0x748] sm:$0xff]
    %v312 = vld [vmem:[#allocation6 + $0x750] sm:$0xff]
    %v313 = vld [vmem:[#allocation6 + $0x758] sm:$0xff]
    %v314 = vld [vmem:[#allocation6 + $0x760] sm:$0xff]
    %v315 = vld [vmem:[#allocation6 + $0x768] sm:$0xff]
    %v316 = vld [vmem:[#allocation6 + $0x770] sm:$0xff]
    %v317 = vld [vmem:[#allocation6 + $0x778] sm:$0xff]
    %v318 = vld [vmem:[#allocation6 + $0x780] sm:$0xff]
    %v319 = vld [vmem:[#allocation6 + $0x788] sm:$0xff]
    %v320 = vld [vmem:[#allocation6 + $0x790] sm:$0xff]
    %v321 = vld [vmem:[#allocation6 + $0x798] sm:$0xff]
    %v322 = vld [vmem:[#allocation6 + $0x7a0] sm:$0xff]
    %v323 = vld [vmem:[#allocation6 + $0x7a8] sm:$0xff]
    %v324 = vld [vmem:[#allocation6 + $0x7b0] sm:$0xff]
    %v325 = vld [vmem:[#allocation6 + $0x7b8] sm:$0xff]
    %v326 = vld [vmem:[#allocation6 + $0x7c0] sm:$0xff]
    %v327 = vld [vmem:[#allocation6 + $0x7c8] sm:$0xff]
    %v328 = vld [vmem:[#allocation6 + $0x7d0] sm:$0xff]
    %v329 = vld [vmem:[#allocation6 + $0x7d8] sm:$0xff]
    %v330 = vld [vmem:[#allocation6 + $0x7e0] sm:$0xff]
    %v331 = vld [vmem:[#allocation6 + $0x7e8] sm:$0xff]
    %v332 = vld [vmem:[#allocation6 + $0x7f0] sm:$0xff]
    %v333 = vld [vmem:[#allocation6 + $0x7f8] sm:$0xff]
    %v334 = vld [vmem:[#allocation6 + $0x800] sm:$0xff]
    %v335 = vld [vmem:[#allocation6 + $0x808] sm:$0xff]
    %v336 = vld [vmem:[#allocation6 + $0x810] sm:$0xff]
    %v337 = vld [vmem:[#allocation6 + $0x818] sm:$0xff]
    %v338 = vld [vmem:[#allocation6 + $0x820] sm:$0xff]
    %v339 = vld [vmem:[#allocation6 + $0x828] sm:$0xff]
    %v340 = vld [vmem:[#allocation6 + $0x830] sm:$0xff]
    %v341 = vld [vmem:[#allocation6 + $0x838] sm:$0xff]
    %v342 = vld [vmem:[#allocation6 + $0x840] sm:$0xff]
    %v343 = vld [vmem:[#allocation6 + $0x848] sm:$0xff]
    %v344 = vld [vmem:[#allocation6 + $0x850] sm:$0xff]
    %v345 = vld [vmem:[#allocation6 + $0x858] sm:$0xff]
    %v346 = vld [vmem:[#allocation6 + $0x860] sm:$0xff]
    %v347 = vld [vmem:[#allocation6 + $0x868] sm:$0xff]
    %v348 = vld [vmem:[#allocation6 + $0x870] sm:$0xff]
    %v349 = vld [vmem:[#allocation6 + $0x878] sm:$0xff]
    %v350 = vld [vmem:[#allocation6 + $0x880] sm:$0xff]
    %v351 = vld [vmem:[#allocation6 + $0x888] sm:$0xff]
    %v352 = vld [vmem:[#allocation6 + $0x890] sm:$0xff]
    %v353 = vld [vmem:[#allocation6 + $0x898] sm:$0xff]
    %v354 = vld [vmem:[#allocation6 + $0x8a0] sm:$0xff]
    %v355 = vld [vmem:[#allocation6 + $0x8a8] sm:$0xff]
    %v356 = vld [vmem:[#allocation6 + $0x8b0] sm:$0xff]
    %v357 = vld [vmem:[#allocation6 + $0x8b8] sm:$0xff]
    %v358 = vld [vmem:[#allocation6 + $0x8c0] sm:$0xff]
    %v359 = vld [vmem:[#allocation6 + $0x8c8] sm:$0xff]
    %v360 = vld [vmem:[#allocation6 + $0x8d0] sm:$0xff]
    %v361 = vld [vmem:[#allocation6 + $0x8d8] sm:$0xff]
    %v362 = vld [vmem:[#allocation6 + $0x8e0] sm:$0xff]
    %v363 = vld [vmem:[#allocation6 + $0x8e8] sm:$0xff]
    %v364 = vld [vmem:[#allocation6 + $0x8f0] sm:$0xff]
    %v365 = vld [vmem:[#allocation6 + $0x8f8] sm:$0xff]
    %v366 = vld [vmem:[#allocation6 + $0x900] sm:$0xff]
    %v367 = vld [vmem:[#allocation6 + $0x908] sm:$0xff]
    %v368 = vld [vmem:[#allocation6 + $0x910] sm:$0xff]
    %v369 = vld [vmem:[#allocation6 + $0x918] sm:$0xff]
    %v370 = vld [vmem:[#allocation6 + $0x920] sm:$0xff]
    %v371 = vld [vmem:[#allocation6 + $0x928] sm:$0xff]
    %v372 = vld [vmem:[#allocation6 + $0x930] sm:$0xff]
    %v373 = vld [vmem:[#allocation6 + $0x938] sm:$0xff]
    %v374 = vld [vmem:[#allocation6 + $0x940] sm:$0xff]
    %v375 = vld [vmem:[#allocation6 + $0x948] sm:$0xff]
    %v376 = vld [vmem:[#allocation6 + $0x950] sm:$0xff]
    %v377 = vld [vmem:[#allocation6 + $0x958] sm:$0xff]
    %v378 = vld [vmem:[#allocation6 + $0x960] sm:$0xff]
    %v379 = vld [vmem:[#allocation6 + $0x968] sm:$0xff]
    %v380 = vld [vmem:[#allocation6 + $0x970] sm:$0xff]
    %v381 = vld [vmem:[#allocation6 + $0x978] sm:$0xff]
    %v382 = vld [vmem:[#allocation6 + $0x980] sm:$0xff]
    %v383 = vld [vmem:[#allocation6 + $0x988] sm:$0xff]
    %v384 = vld [vmem:[#allocation6 + $0x990] sm:$0xff]
    %v385 = vld [vmem:[#allocation6 + $0x998] sm:$0xff]
    %v386 = vld [vmem:[#allocation6 + $0x9a0] sm:$0xff]
    %v387 = vld [vmem:[#allocation6 + $0x9a8] sm:$0xff]
    %v388 = vld [vmem:[#allocation6 + $0x9b0] sm:$0xff]
    %v389 = vld [vmem:[#allocation6 + $0x9b8] sm:$0xff]
    %v390 = vld [vmem:[#allocation6 + $0x9c0] sm:$0xff]
    %v391 = vld [vmem:[#allocation6 + $0x9c8] sm:$0xff]
    %v392 = vld [vmem:[#allocation6 + $0x9d0] sm:$0xff]
    %v393 = vld [vmem:[#allocation6 + $0x9d8] sm:$0xff]
    %v394 = vld [vmem:[#allocation6 + $0x9e0] sm:$0xff]
    %v395 = vld [vmem:[#allocation6 + $0x9e8] sm:$0xff]
    %v396 = vld [vmem:[#allocation6 + $0x9f0] sm:$0xff]
    %v397 = vld [vmem:[#allocation6 + $0x9f8] sm:$0xff]
    %v400 = vunpack.c.l.b16 %v76
    %v401 = vunpack.c.h.b16 %v76
    %v402 = vunpack.c.l.b16 %v77
    %v403 = vunpack.c.h.b16 %v77
    %v404 = vpack.c.b16 %v400, %v400
    %v405 = vpack.c.b16 %v401, %v401
    %v406 = vpack.c.b16 %v402, %v402
    %v407 = vpack.c.b16 %v403, %v403
    %v732 = vunpack.c.l.b16 %v78
    %v733 = vunpack.c.h.b16 %v78
    %v734 = vunpack.c.l.b16 %v79
    %v735 = vunpack.c.h.b16 %v79
    %v736 = vunpack.c.l.b16 %v80
    %v737 = vunpack.c.h.b16 %v80
    %v738 = vunpack.c.l.b16 %v81
    %v739 = vunpack.c.h.b16 %v81
    %v740 = vunpack.c.l.b16 %v82
    %v741 = vunpack.c.h.b16 %v82
    %v742 = vunpack.c.l.b16 %v83
    %v743 = vunpack.c.h.b16 %v83
    %v744 = vunpack.c.l.b16 %v84
    %v745 = vunpack.c.h.b16 %v84
    %v746 = vunpack.c.l.b16 %v85
    %v747 = vunpack.c.h.b16 %v85
    %v748 = vunpack.c.l.b16 %v86
    %v749 = vunpack.c.h.b16 %v86
    %v750 = vunpack.c.l.b16 %v87
    %v751 = vunpack.c.h.b16 %v87
    %v752 = vunpack.c.l.b16 %v88
    %v753 = vunpack.c.h.b16 %v88
    %v754 = vunpack.c.l.b16 %v89
    %v755 = vunpack.c.h.b16 %v89
    %v756 = vunpack.c.l.b16 %v90
    %v757 = vunpack.c.h.b16 %v90
    %v758 = vunpack.c.l.b16 %v91
    %v759 = vunpack.c.h.b16 %v91
    %v760 = vunpack.c.l.b16 %v92
    %v761 = vunpack.c.h.b16 %v92
    %v762 = vunpack.c.l.b16 %v93
    %v763 = vunpack.c.h.b16 %v93
    %v764 = vunpack.c.l.b16 %v94
    %v765 = vunpack.c.h.b16 %v94
    %v766 = vunpack.c.l.b16 %v95
    %v767 = vunpack.c.h.b16 %v95
    %v768 = vunpack.c.l.b16 %v96
    %v769 = vunpack.c.h.b16 %v96
    %v770 = vunpack.c.l.b16 %v97
    %v771 = vunpack.c.h.b16 %v97
    %v772 = vunpack.c.l.b16 %v98
    %v773 = vunpack.c.h.b16 %v98
    %v774 = vunpack.c.l.b16 %v99
    %v775 = vunpack.c.h.b16 %v99
    %v776 = vunpack.c.l.b16 %v100
    %v777 = vunpack.c.h.b16 %v100
    %v778 = vunpack.c.l.b16 %v101
    %v779 = vunpack.c.h.b16 %v101
    %v780 = vunpack.c.l.b16 %v102
    %v781 = vunpack.c.h.b16 %v102
    %v782 = vunpack.c.l.b16 %v103
    %v783 = vunpack.c.h.b16 %v103
    %v784 = vunpack.c.l.b16 %v104
    %v785 = vunpack.c.h.b16 %v104
    %v786 = vunpack.c.l.b16 %v105
    %v787 = vunpack.c.h.b16 %v105
    %v788 = vunpack.c.l.b16 %v106
    %v789 = vunpack.c.h.b16 %v106
    %v790 = vunpack.c.l.b16 %v107
    %v791 = vunpack.c.h.b16 %v107
    %v792 = vunpack.c.l.b16 %v108
    %v793 = vunpack.c.h.b16 %v108
    %v794 = vunpack.c.l.b16 %v109
    %v795 = vunpack.c.h.b16 %v109
    %v796 = vunpack.c.l.b16 %v110
    %v797 = vunpack.c.h.b16 %v110
    %v798 = vunpack.c.l.b16 %v111
    %v799 = vunpack.c.h.b16 %v111
    %v800 = vunpack.c.l.b16 %v112
    %v801 = vunpack.c.h.b16 %v112
    %v802 = vunpack.c.l.b16 %v113
    %v803 = vunpack.c.h.b16 %v113
    %v804 = vunpack.c.l.b16 %v114
    %v805 = vunpack.c.h.b16 %v114
    %v806 = vunpack.c.l.b16 %v115
    %v807 = vunpack.c.h.b16 %v115
    %v808 = vunpack.c.l.b16 %v116
    %v809 = vunpack.c.h.b16 %v116
    %v810 = vunpack.c.l.b16 %v117
    %v811 = vunpack.c.h.b16 %v117
    %v812 = vunpack.c.l.b16 %v118
    %v813 = vunpack.c.h.b16 %v118
    %v814 = vunpack.c.l.b16 %v119
    %v815 = vunpack.c.h.b16 %v119
    %v816 = vunpack.c.l.b16 %v120
    %v817 = vunpack.c.h.b16 %v120
    %v818 = vunpack.c.l.b16 %v121
    %v819 = vunpack.c.h.b16 %v121
    %v820 = vunpack.c.l.b16 %v122
    %v821 = vunpack.c.h.b16 %v122
    %v822 = vunpack.c.l.b16 %v123
    %v823 = vunpack.c.h.b16 %v123
    %v824 = vunpack.c.l.b16 %v124
    %v825 = vunpack.c.h.b16 %v124
    %v826 = vunpack.c.l.b16 %v125
    %v827 = vunpack.c.h.b16 %v125
    %v828 = vunpack.c.l.b16 %v126
    %v829 = vunpack.c.h.b16 %v126
    %v830 = vunpack.c.l.b16 %v127
    %v831 = vunpack.c.h.b16 %v127
    %v832 = vunpack.c.l.b16 %v128
    %v833 = vunpack.c.h.b16 %v128
    %v834 = vunpack.c.l.b16 %v129
    %v835 = vunpack.c.h.b16 %v129
    %v836 = vunpack.c.l.b16 %v130
    %v837 = vunpack.c.h.b16 %v130
    %v838 = vunpack.c.l.b16 %v131
    %v839 = vunpack.c.h.b16 %v131
    %v840 = vunpack.c.l.b16 %v132
    %v841 = vunpack.c.h.b16 %v132
    %v842 = vunpack.c.l.b16 %v133
    %v843 = vunpack.c.h.b16 %v133
    %v844 = vunpack.c.l.b16 %v134
    %v845 = vunpack.c.h.b16 %v134
    %v846 = vunpack.c.l.b16 %v135
    %v847 = vunpack.c.h.b16 %v135
    %v848 = vunpack.c.l.b16 %v136
    %v849 = vunpack.c.h.b16 %v136
    %v850 = vunpack.c.l.b16 %v137
    %v851 = vunpack.c.h.b16 %v137
    %v852 = vunpack.c.l.b16 %v138
    %v853 = vunpack.c.h.b16 %v138
    %v854 = vunpack.c.l.b16 %v139
    %v855 = vunpack.c.h.b16 %v139
    %v856 = vunpack.c.l.b16 %v140
    %v857 = vunpack.c.h.b16 %v140
    %v858 = vunpack.c.l.b16 %v141
    %v859 = vunpack.c.h.b16 %v141
    %v860 = vunpack.c.l.b16 %v142
    %v861 = vunpack.c.h.b16 %v142
    %v862 = vunpack.c.l.b16 %v143
    %v863 = vunpack.c.h.b16 %v143
    %v864 = vunpack.c.l.b16 %v144
    %v865 = vunpack.c.h.b16 %v144
    %v866 = vunpack.c.l.b16 %v145
    %v867 = vunpack.c.h.b16 %v145
    %v868 = vunpack.c.l.b16 %v146
    %v869 = vunpack.c.h.b16 %v146
    %v870 = vunpack.c.l.b16 %v147
    %v871 = vunpack.c.h.b16 %v147
    %v872 = vunpack.c.l.b16 %v148
    %v873 = vunpack.c.h.b16 %v148
    %v874 = vunpack.c.l.b16 %v149
    %v875 = vunpack.c.h.b16 %v149
    %v876 = vunpack.c.l.b16 %v150
    %v877 = vunpack.c.h.b16 %v150
    %v878 = vunpack.c.l.b16 %v151
    %v879 = vunpack.c.h.b16 %v151
    %v880 = vunpack.c.l.b16 %v152
    %v881 = vunpack.c.h.b16 %v152
    %v882 = vunpack.c.l.b16 %v153
    %v883 = vunpack.c.h.b16 %v153
    %v884 = vunpack.c.l.b16 %v154
    %v885 = vunpack.c.h.b16 %v154
    %v886 = vunpack.c.l.b16 %v155
    %v887 = vunpack.c.h.b16 %v155
    %v888 = vunpack.c.l.b16 %v156
    %v889 = vunpack.c.h.b16 %v156
    %v890 = vunpack.c.l.b16 %v157
    %v891 = vunpack.c.h.b16 %v157
    %v892 = vunpack.c.l.b16 %v158
    %v893 = vunpack.c.h.b16 %v158
    %v894 = vunpack.c.l.b16 %v159
    %v895 = vunpack.c.h.b16 %v159
    %v896 = vunpack.c.l.b16 %v160
    %v897 = vunpack.c.h.b16 %v160
    %v898 = vunpack.c.l.b16 %v161
    %v899 = vunpack.c.h.b16 %v161
    %v900 = vunpack.c.l.b16 %v162
    %v901 = vunpack.c.h.b16 %v162
    %v902 = vunpack.c.l.b16 %v163
    %v903 = vunpack.c.h.b16 %v163
    %v904 = vunpack.c.l.b16 %v164
    %v905 = vunpack.c.h.b16 %v164
    %v906 = vunpack.c.l.b16 %v165
    %v907 = vunpack.c.h.b16 %v165
    %v908 = vunpack.c.l.b16 %v166
    %v909 = vunpack.c.h.b16 %v166
    %v910 = vunpack.c.l.b16 %v167
    %v911 = vunpack.c.h.b16 %v167
    %v912 = vunpack.c.l.b16 %v168
    %v913 = vunpack.c.h.b16 %v168
    %v914 = vunpack.c.l.b16 %v169
    %v915 = vunpack.c.h.b16 %v169
    %v916 = vunpack.c.l.b16 %v170
    %v917 = vunpack.c.h.b16 %v170
    %v918 = vunpack.c.l.b16 %v171
    %v919 = vunpack.c.h.b16 %v171
    %v920 = vunpack.c.l.b16 %v172
    %v921 = vunpack.c.h.b16 %v172
    %v922 = vunpack.c.l.b16 %v173
    %v923 = vunpack.c.h.b16 %v173
    %v924 = vunpack.c.l.b16 %v174
    %v925 = vunpack.c.h.b16 %v174
    %v926 = vunpack.c.l.b16 %v175
    %v927 = vunpack.c.h.b16 %v175
    %v928 = vunpack.c.l.b16 %v176
    %v929 = vunpack.c.h.b16 %v176
    %v930 = vunpack.c.l.b16 %v177
    %v931 = vunpack.c.h.b16 %v177
    %v932 = vunpack.c.l.b16 %v178
    %v933 = vunpack.c.h.b16 %v178
    %v934 = vunpack.c.l.b16 %v179
    %v935 = vunpack.c.h.b16 %v179
    %v936 = vunpack.c.l.b16 %v180
    %v937 = vunpack.c.h.b16 %v180
    %v938 = vunpack.c.l.b16 %v181
    %v939 = vunpack.c.h.b16 %v181
    %v940 = vunpack.c.l.b16 %v182
    %v941 = vunpack.c.h.b16 %v182
    %v942 = vunpack.c.l.b16 %v183
    %v943 = vunpack.c.h.b16 %v183
    %v944 = vunpack.c.l.b16 %v184
    %v945 = vunpack.c.h.b16 %v184
    %v946 = vunpack.c.l.b16 %v185
    %v947 = vunpack.c.h.b16 %v185
    %v948 = vunpack.c.l.b16 %v186
    %v949 = vunpack.c.h.b16 %v186
    %v950 = vunpack.c.l.b16 %v187
    %v951 = vunpack.c.h.b16 %v187
    %v952 = vunpack.c.l.b16 %v188
    %v953 = vunpack.c.h.b16 %v188
    %v954 = vunpack.c.l.b16 %v189
    %v955 = vunpack.c.h.b16 %v189
    %v956 = vunpack.c.l.b16 %v190
    %v957 = vunpack.c.h.b16 %v190
    %v958 = vunpack.c.l.b16 %v191
    %v959 = vunpack.c.h.b16 %v191
    %v960 = vunpack.c.l.b16 %v192
    %v961 = vunpack.c.h.b16 %v192
    %v962 = vunpack.c.l.b16 %v193
    %v963 = vunpack.c.h.b16 %v193
    %v964 = vunpack.c.l.b16 %v194
    %v965 = vunpack.c.h.b16 %v194
    %v966 = vunpack.c.l.b16 %v195
    %v967 = vunpack.c.h.b16 %v195
    %v968 = vunpack.c.l.b16 %v196
    %v969 = vunpack.c.h.b16 %v196
    %v970 = vunpack.c.l.b16 %v197
    %v971 = vunpack.c.h.b16 %v197
    %v972 = vunpack.c.l.b16 %v198
    %v973 = vunpack.c.h.b16 %v198
    %v974 = vunpack.c.l.b16 %v199
    %v975 = vunpack.c.h.b16 %v199
    %v976 = vunpack.c.l.b16 %v200
    %v977 = vunpack.c.h.b16 %v200
    %v978 = vunpack.c.l.b16 %v201
    %v979 = vunpack.c.h.b16 %v201
    %v980 = vunpack.c.l.b16 %v202
    %v981 = vunpack.c.h.b16 %v202
    %v982 = vunpack.c.l.b16 %v203
    %v983 = vunpack.c.h.b16 %v203
    %v984 = vunpack.c.l.b16 %v204
    %v985 = vunpack.c.h.b16 %v204
    %v986 = vunpack.c.l.b16 %v205
    %v987 = vunpack.c.h.b16 %v205
    %v988 = vunpack.c.l.b16 %v206
    %v989 = vunpack.c.h.b16 %v206
    %v990 = vunpack.c.l.b16 %v207
    %v991 = vunpack.c.h.b16 %v207
    %v992 = vunpack.c.l.b16 %v208
    %v993 = vunpack.c.h.b16 %v208
    %v994 = vunpack.c.l.b16 %v209
    %v995 = vunpack.c.h.b16 %v209
    %v996 = vunpack.c.l.b16 %v210
    %v997 = vunpack.c.h.b16 %v210
    %v998 = vunpack.c.l.b16 %v211
    %v999 = vunpack.c.h.b16 %v211
    %v1000 = vunpack.c.l.b16 %v212
    %v1001 = vunpack.c.h.b16 %v212
    %v1002 = vunpack.c.l.b16 %v213
    %v1003 = vunpack.c.h.b16 %v213
    %v1004 = vunpack.c.l.b16 %v214
    %v1005 = vunpack.c.h.b16 %v214
    %v1006 = vunpack.c.l.b16 %v215
    %v1007 = vunpack.c.h.b16 %v215
    %v1008 = vunpack.c.l.b16 %v216
    %v1009 = vunpack.c.h.b16 %v216
    %v1010 = vunpack.c.l.b16 %v217
    %v1011 = vunpack.c.h.b16 %v217
    %v1012 = vunpack.c.l.b16 %v218
    %v1013 = vunpack.c.h.b16 %v218
    %v1014 = vunpack.c.l.b16 %v219
    %v1015 = vunpack.c.h.b16 %v219
    %v1016 = vunpack.c.l.b16 %v220
    %v1017 = vunpack.c.h.b16 %v220
    %v1018 = vunpack.c.l.b16 %v221
    %v1019 = vunpack.c.h.b16 %v221
    %v1020 = vunpack.c.l.b16 %v222
    %v1021 = vunpack.c.h.b16 %v222
    %v1022 = vunpack.c.l.b16 %v223
    %v1023 = vunpack.c.h.b16 %v223
    %v1024 = vunpack.c.l.b16 %v224
    %v1025 = vunpack.c.h.b16 %v224
    %v1026 = vunpack.c.l.b16 %v225
    %v1027 = vunpack.c.h.b16 %v225
    %v1028 = vunpack.c.l.b16 %v226
    %v1029 = vunpack.c.h.b16 %v226
    %v1030 = vunpack.c.l.b16 %v227
    %v1031 = vunpack.c.h.b16 %v227
    %v1032 = vunpack.c.l.b16 %v228
    %v1033 = vunpack.c.h.b16 %v228
    %v1034 = vunpack.c.l.b16 %v229
    %v1035 = vunpack.c.h.b16 %v229
    %v1036 = vunpack.c.l.b16 %v230
    %v1037 = vunpack.c.h.b16 %v230
    %v1038 = vunpack.c.l.b16 %v231
    %v1039 = vunpack.c.h.b16 %v231
    %v1040 = vunpack.c.l.b16 %v232
    %v1041 = vunpack.c.h.b16 %v232
    %v1042 = vunpack.c.l.b16 %v233
    %v1043 = vunpack.c.h.b16 %v233
    %v1044 = vunpack.c.l.b16 %v234
    %v1045 = vunpack.c.h.b16 %v234
    %v1046 = vunpack.c.l.b16 %v235
    %v1047 = vunpack.c.h.b16 %v235
    %v1048 = vunpack.c.l.b16 %v236
    %v1049 = vunpack.c.h.b16 %v236
    %v1050 = vunpack.c.l.b16 %v237
    %v1051 = vunpack.c.h.b16 %v237
    %v1052 = vunpack.c.l.b16 %v238
    %v1053 = vunpack.c.h.b16 %v238
    %v1054 = vunpack.c.l.b16 %v239
    %v1055 = vunpack.c.h.b16 %v239
    %v1056 = vunpack.c.l.b16 %v240
    %v1057 = vunpack.c.h.b16 %v240
    %v1058 = vunpack.c.l.b16 %v241
    %v1059 = vunpack.c.h.b16 %v241
    %v1060 = vunpack.c.l.b16 %v242
    %v1061 = vunpack.c.h.b16 %v242
    %v1062 = vunpack.c.l.b16 %v243
    %v1063 = vunpack.c.h.b16 %v243
    %v1064 = vunpack.c.l.b16 %v244
    %v1065 = vunpack.c.h.b16 %v244
    %v1066 = vunpack.c.l.b16 %v245
    %v1067 = vunpack.c.h.b16 %v245
    %v1068 = vunpack.c.l.b16 %v246
    %v1069 = vunpack.c.h.b16 %v246
    %v1070 = vunpack.c.l.b16 %v247
    %v1071 = vunpack.c.h.b16 %v247
    %v1072 = vunpack.c.l.b16 %v248
    %v1073 = vunpack.c.h.b16 %v248
    %v1074 = vunpack.c.l.b16 %v249
    %v1075 = vunpack.c.h.b16 %v249
    %v1076 = vunpack.c.l.b16 %v250
    %v1077 = vunpack.c.h.b16 %v250
    %v1078 = vunpack.c.l.b16 %v251
    %v1079 = vunpack.c.h.b16 %v251
    %v1080 = vunpack.c.l.b16 %v252
    %v1081 = vunpack.c.h.b16 %v252
    %v1082 = vunpack.c.l.b16 %v253
    %v1083 = vunpack.c.h.b16 %v253
    %v1084 = vunpack.c.l.b16 %v254
    %v1085 = vunpack.c.h.b16 %v254
    %v1086 = vunpack.c.l.b16 %v255
    %v1087 = vunpack.c.h.b16 %v255
    %v1088 = vunpack.c.l.b16 %v256
    %v1089 = vunpack.c.h.b16 %v256
    %v1090 = vunpack.c.l.b16 %v257
    %v1091 = vunpack.c.h.b16 %v257
    %v1092 = vunpack.c.l.b16 %v258
    %v1093 = vunpack.c.h.b16 %v258
    %v1094 = vunpack.c.l.b16 %v259
    %v1095 = vunpack.c.h.b16 %v259
    %v1096 = vunpack.c.l.b16 %v260
    %v1097 = vunpack.c.h.b16 %v260
    %v1098 = vunpack.c.l.b16 %v261
    %v1099 = vunpack.c.h.b16 %v261
    %v1100 = vunpack.c.l.b16 %v262
    %v1101 = vunpack.c.h.b16 %v262
    %v1102 = vunpack.c.l.b16 %v263
    %v1103 = vunpack.c.h.b16 %v263
    %v1104 = vunpack.c.l.b16 %v264
    %v1105 = vunpack.c.h.b16 %v264
    %v1106 = vunpack.c.l.b16 %v265
    %v1107 = vunpack.c.h.b16 %v265
    %v1108 = vunpack.c.l.b16 %v266
    %v1109 = vunpack.c.h.b16 %v266
    %v1110 = vunpack.c.l.b16 %v267
    %v1111 = vunpack.c.h.b16 %v267
    %v1112 = vunpack.c.l.b16 %v268
    %v1113 = vunpack.c.h.b16 %v268
    %v1114 = vunpack.c.l.b16 %v269
    %v1115 = vunpack.c.h.b16 %v269
    %v1116 = vunpack.c.l.b16 %v270
    %v1117 = vunpack.c.h.b16 %v270
    %v1118 = vunpack.c.l.b16 %v271
    %v1119 = vunpack.c.h.b16 %v271
    %v1120 = vunpack.c.l.b16 %v272
    %v1121 = vunpack.c.h.b16 %v272
    %v1122 = vunpack.c.l.b16 %v273
    %v1123 = vunpack.c.h.b16 %v273
    %v1124 = vunpack.c.l.b16 %v274
    %v1125 = vunpack.c.h.b16 %v274
    %v1126 = vunpack.c.l.b16 %v275
    %v1127 = vunpack.c.h.b16 %v275
    %v1128 = vunpack.c.l.b16 %v276
    %v1129 = vunpack.c.h.b16 %v276
    %v1130 = vunpack.c.l.b16 %v277
    %v1131 = vunpack.c.h.b16 %v277
    %v1132 = vunpack.c.l.b16 %v278
    %v1133 = vunpack.c.h.b16 %v278
    %v1134 = vunpack.c.l.b16 %v279
    %v1135 = vunpack.c.h.b16 %v279
    %v1136 = vunpack.c.l.b16 %v280
    %v1137 = vunpack.c.h.b16 %v280
    %v1138 = vunpack.c.l.b16 %v281
    %v1139 = vunpack.c.h.b16 %v281
    %v1140 = vunpack.c.l.b16 %v282
    %v1141 = vunpack.c.h.b16 %v282
    %v1142 = vunpack.c.l.b16 %v283
    %v1143 = vunpack.c.h.b16 %v283
    %v1144 = vunpack.c.l.b16 %v284
    %v1145 = vunpack.c.h.b16 %v284
    %v1146 = vunpack.c.l.b16 %v285
    %v1147 = vunpack.c.h.b16 %v285
    %v1148 = vunpack.c.l.b16 %v286
    %v1149 = vunpack.c.h.b16 %v286
    %v1150 = vunpack.c.l.b16 %v287
    %v1151 = vunpack.c.h.b16 %v287
    %v1152 = vunpack.c.l.b16 %v288
    %v1153 = vunpack.c.h.b16 %v288
    %v1154 = vunpack.c.l.b16 %v289
    %v1155 = vunpack.c.h.b16 %v289
    %v1156 = vunpack.c.l.b16 %v290
    %v1157 = vunpack.c.h.b16 %v290
    %v1158 = vunpack.c.l.b16 %v291
    %v1159 = vunpack.c.h.b16 %v291
    %v1160 = vunpack.c.l.b16 %v292
    %v1161 = vunpack.c.h.b16 %v292
    %v1162 = vunpack.c.l.b16 %v293
    %v1163 = vunpack.c.h.b16 %v293
    %v1164 = vunpack.c.l.b16 %v294
    %v1165 = vunpack.c.h.b16 %v294
    %v1166 = vunpack.c.l.b16 %v295
    %v1167 = vunpack.c.h.b16 %v295
    %v1168 = vunpack.c.l.b16 %v296
    %v1169 = vunpack.c.h.b16 %v296
    %v1170 = vunpack.c.l.b16 %v297
    %v1171 = vunpack.c.h.b16 %v297
    %v1172 = vunpack.c.l.b16 %v298
    %v1173 = vunpack.c.h.b16 %v298
    %v1174 = vunpack.c.l.b16 %v299
    %v1175 = vunpack.c.h.b16 %v299
    %v1176 = vunpack.c.l.b16 %v300
    %v1177 = vunpack.c.h.b16 %v300
    %v1178 = vunpack.c.l.b16 %v301
    %v1179 = vunpack.c.h.b16 %v301
    %v1180 = vunpack.c.l.b16 %v302
    %v1181 = vunpack.c.h.b16 %v302
    %v1182 = vunpack.c.l.b16 %v303
    %v1183 = vunpack.c.h.b16 %v303
    %v1184 = vunpack.c.l.b16 %v304
    %v1185 = vunpack.c.h.b16 %v304
    %v1186 = vunpack.c.l.b16 %v305
    %v1187 = vunpack.c.h.b16 %v305
    %v1188 = vunpack.c.l.b16 %v306
    %v1189 = vunpack.c.h.b16 %v306
    %v1190 = vunpack.c.l.b16 %v307
    %v1191 = vunpack.c.h.b16 %v307
    %v1192 = vunpack.c.l.b16 %v308
    %v1193 = vunpack.c.h.b16 %v308
    %v1194 = vunpack.c.l.b16 %v309
    %v1195 = vunpack.c.h.b16 %v309
    %v1196 = vunpack.c.l.b16 %v310
    %v1197 = vunpack.c.h.b16 %v310
    %v1198 = vunpack.c.l.b16 %v311
    %v1199 = vunpack.c.h.b16 %v311
    %v1200 = vunpack.c.l.b16 %v312
    %v1201 = vunpack.c.h.b16 %v312
    %v1202 = vunpack.c.l.b16 %v313
    %v1203 = vunpack.c.h.b16 %v313
    %v1204 = vunpack.c.l.b16 %v314
    %v1205 = vunpack.c.h.b16 %v314
    %v1206 = vunpack.c.l.b16 %v315
    %v1207 = vunpack.c.h.b16 %v315
    %v1208 = vunpack.c.l.b16 %v316
    %v1209 = vunpack.c.h.b16 %v316
    %v1210 = vunpack.c.l.b16 %v317
    %v1211 = vunpack.c.h.b16 %v317
    %v1212 = vunpack.c.l.b16 %v318
    %v1213 = vunpack.c.h.b16 %v318
    %v1214 = vunpack.c.l.b16 %v319
    %v1215 = vunpack.c.h.b16 %v319
    %v1216 = vunpack.c.l.b16 %v320
    %v1217 = vunpack.c.h.b16 %v320
    %v1218 = vunpack.c.l.b16 %v321
    %v1219 = vunpack.c.h.b16 %v321
    %v1220 = vunpack.c.l.b16 %v322
    %v1221 = vunpack.c.h.b16 %v322
    %v1222 = vunpack.c.l.b16 %v323
    %v1223 = vunpack.c.h.b16 %v323
    %v1224 = vunpack.c.l.b16 %v324
    %v1225 = vunpack.c.h.b16 %v324
    %v1226 = vunpack.c.l.b16 %v325
    %v1227 = vunpack.c.h.b16 %v325
    %v1228 = vunpack.c.l.b16 %v326
    %v1229 = vunpack.c.h.b16 %v326
    %v1230 = vunpack.c.l.b16 %v327
    %v1231 = vunpack.c.h.b16 %v327
    %v1232 = vunpack.c.l.b16 %v328
    %v1233 = vunpack.c.h.b16 %v328
    %v1234 = vunpack.c.l.b16 %v329
    %v1235 = vunpack.c.h.b16 %v329
    %v1236 = vunpack.c.l.b16 %v330
    %v1237 = vunpack.c.h.b16 %v330
    %v1238 = vunpack.c.l.b16 %v331
    %v1239 = vunpack.c.h.b16 %v331
    %v1240 = vunpack.c.l.b16 %v332
    %v1241 = vunpack.c.h.b16 %v332
    %v1242 = vunpack.c.l.b16 %v333
    %v1243 = vunpack.c.h.b16 %v333
    %v1244 = vunpack.c.l.b16 %v334
    %v1245 = vunpack.c.h.b16 %v334
    %v1246 = vunpack.c.l.b16 %v335
    %v1247 = vunpack.c.h.b16 %v335
    %v1248 = vunpack.c.l.b16 %v336
    %v1249 = vunpack.c.h.b16 %v336
    %v1250 = vunpack.c.l.b16 %v337
    %v1251 = vunpack.c.h.b16 %v337
    %v1252 = vunpack.c.l.b16 %v338
    %v1253 = vunpack.c.h.b16 %v338
    %v1254 = vunpack.c.l.b16 %v339
    %v1255 = vunpack.c.h.b16 %v339
    %v1256 = vunpack.c.l.b16 %v340
    %v1257 = vunpack.c.h.b16 %v340
    %v1258 = vunpack.c.l.b16 %v341
    %v1259 = vunpack.c.h.b16 %v341
    %v1260 = vunpack.c.l.b16 %v342
    %v1261 = vunpack.c.h.b16 %v342
    %v1262 = vunpack.c.l.b16 %v343
    %v1263 = vunpack.c.h.b16 %v343
    %v1264 = vunpack.c.l.b16 %v344
    %v1265 = vunpack.c.h.b16 %v344
    %v1266 = vunpack.c.l.b16 %v345
    %v1267 = vunpack.c.h.b16 %v345
    %v1268 = vunpack.c.l.b16 %v346
    %v1269 = vunpack.c.h.b16 %v346
    %v1270 = vunpack.c.l.b16 %v347
    %v1271 = vunpack.c.h.b16 %v347
    %v1272 = vunpack.c.l.b16 %v348
    %v1273 = vunpack.c.h.b16 %v348
    %v1274 = vunpack.c.l.b16 %v349
    %v1275 = vunpack.c.h.b16 %v349
    %v1276 = vunpack.c.l.b16 %v350
    %v1277 = vunpack.c.h.b16 %v350
    %v1278 = vunpack.c.l.b16 %v351
    %v1279 = vunpack.c.h.b16 %v351
    %v1280 = vunpack.c.l.b16 %v352
    %v1281 = vunpack.c.h.b16 %v352
    %v1282 = vunpack.c.l.b16 %v353
    %v1283 = vunpack.c.h.b16 %v353
    %v1284 = vunpack.c.l.b16 %v354
    %v1285 = vunpack.c.h.b16 %v354
    %v1286 = vunpack.c.l.b16 %v355
    %v1287 = vunpack.c.h.b16 %v355
    %v1288 = vunpack.c.l.b16 %v356
    %v1289 = vunpack.c.h.b16 %v356
    %v1290 = vunpack.c.l.b16 %v357
    %v1291 = vunpack.c.h.b16 %v357
    %v1292 = vunpack.c.l.b16 %v358
    %v1293 = vunpack.c.h.b16 %v358
    %v1294 = vunpack.c.l.b16 %v359
    %v1295 = vunpack.c.h.b16 %v359
    %v1296 = vunpack.c.l.b16 %v360
    %v1297 = vunpack.c.h.b16 %v360
    %v1298 = vunpack.c.l.b16 %v361
    %v1299 = vunpack.c.h.b16 %v361
    %v1300 = vunpack.c.l.b16 %v362
    %v1301 = vunpack.c.h.b16 %v362
    %v1302 = vunpack.c.l.b16 %v363
    %v1303 = vunpack.c.h.b16 %v363
    %v1304 = vunpack.c.l.b16 %v364
    %v1305 = vunpack.c.h.b16 %v364
    %v1306 = vunpack.c.l.b16 %v365
    %v1307 = vunpack.c.h.b16 %v365
    %v1308 = vunpack.c.l.b16 %v366
    %v1309 = vunpack.c.h.b16 %v366
    %v1310 = vunpack.c.l.b16 %v367
    %v1311 = vunpack.c.h.b16 %v367
    %v1312 = vunpack.c.l.b16 %v368
    %v1313 = vunpack.c.h.b16 %v368
    %v1314 = vunpack.c.l.b16 %v369
    %v1315 = vunpack.c.h.b16 %v369
    %v1316 = vunpack.c.l.b16 %v370
    %v1317 = vunpack.c.h.b16 %v370
    %v1318 = vunpack.c.l.b16 %v371
    %v1319 = vunpack.c.h.b16 %v371
    %v1320 = vunpack.c.l.b16 %v372
    %v1321 = vunpack.c.h.b16 %v372
    %v1322 = vunpack.c.l.b16 %v373
    %v1323 = vunpack.c.h.b16 %v373
    %v1324 = vunpack.c.l.b16 %v374
    %v1325 = vunpack.c.h.b16 %v374
    %v1326 = vunpack.c.l.b16 %v375
    %v1327 = vunpack.c.h.b16 %v375
    %v1328 = vunpack.c.l.b16 %v376
    %v1329 = vunpack.c.h.b16 %v376
    %v1330 = vunpack.c.l.b16 %v377
    %v1331 = vunpack.c.h.b16 %v377
    %v1332 = vunpack.c.l.b16 %v378
    %v1333 = vunpack.c.h.b16 %v378
    %v1334 = vunpack.c.l.b16 %v379
    %v1335 = vunpack.c.h.b16 %v379
    %v1336 = vunpack.c.l.b16 %v380
    %v1337 = vunpack.c.h.b16 %v380
    %v1338 = vunpack.c.l.b16 %v381
    %v1339 = vunpack.c.h.b16 %v381
    %v1340 = vunpack.c.l.b16 %v382
    %v1341 = vunpack.c.h.b16 %v382
    %v1342 = vunpack.c.l.b16 %v383
    %v1343 = vunpack.c.h.b16 %v383
    %v1344 = vunpack.c.l.b16 %v384
    %v1345 = vunpack.c.h.b16 %v384
    %v1346 = vunpack.c.l.b16 %v385
    %v1347 = vunpack.c.h.b16 %v385
    %v1348 = vunpack.c.l.b16 %v386
    %v1349 = vunpack.c.h.b16 %v386
    %v1350 = vunpack.c.l.b16 %v387
    %v1351 = vunpack.c.h.b16 %v387
    %v1352 = vunpack.c.l.b16 %v388
    %v1353 = vunpack.c.h.b16 %v388
    %v1354 = vunpack.c.l.b16 %v389
    %v1355 = vunpack.c.h.b16 %v389
    %v1356 = vunpack.c.l.b16 %v390
    %v1357 = vunpack.c.h.b16 %v390
    %v1358 = vunpack.c.l.b16 %v391
    %v1359 = vunpack.c.h.b16 %v391
    %v1360 = vunpack.c.l.b16 %v392
    %v1361 = vunpack.c.h.b16 %v392
    %v1362 = vunpack.c.l.b16 %v393
    %v1363 = vunpack.c.h.b16 %v393
    %v1364 = vunpack.c.l.b16 %v394
    %v1365 = vunpack.c.h.b16 %v394
    %v1366 = vunpack.c.l.b16 %v395
    %v1367 = vunpack.c.h.b16 %v395
    %v1368 = vunpack.c.l.b16 %v396
    %v1369 = vunpack.c.h.b16 %v396
    %v1370 = vunpack.c.l.b16 %v397
    %v1371 = vunpack.c.h.b16 %v397
    %v1372 = vpack.c.b16 %v742, %v732
    %v1373 = vpack.c.b16 %v743, %v733
    %v1374 = vpack.c.b16 %v744, %v734
    %v1375 = vpack.c.b16 %v745, %v735
    %v1376 = vpack.c.b16 %v746, %v736
    %v1377 = vpack.c.b16 %v747, %v737
    %v1378 = vpack.c.b16 %v748, %v738
    %v1379 = vpack.c.b16 %v749, %v739
    %v1380 = vpack.c.b16 %v750, %v740
    %v1381 = vpack.c.b16 %v751, %v741
    %v1382 = vpack.c.b16 %v762, %v752
    %v1383 = vpack.c.b16 %v763, %v753
    %v1384 = vpack.c.b16 %v764, %v754
    %v1385 = vpack.c.b16 %v765, %v755
    %v1386 = vpack.c.b16 %v766, %v756
    %v1387 = vpack.c.b16 %v767, %v757
    %v1388 = vpack.c.b16 %v768, %v758
    %v1389 = vpack.c.b16 %v769, %v759
    %v1390 = vpack.c.b16 %v770, %v760
    %v1391 = vpack.c.b16 %v771, %v761
    %v1392 = vpack.c.b16 %v782, %v772
    %v1393 = vpack.c.b16 %v783, %v773
    %v1394 = vpack.c.b16 %v784, %v774
    %v1395 = vpack.c.b16 %v785, %v775
    %v1396 = vpack.c.b16 %v786, %v776
    %v1397 = vpack.c.b16 %v787, %v777
    %v1398 = vpack.c.b16 %v788, %v778
    %v1399 = vpack.c.b16 %v789, %v779
    %v1400 = vpack.c.b16 %v790, %v780
    %v1401 = vpack.c.b16 %v791, %v781
    %v1402 = vpack.c.b16 %v802, %v792
    %v1403 = vpack.c.b16 %v803, %v793
    %v1404 = vpack.c.b16 %v804, %v794
    %v1405 = vpack.c.b16 %v805, %v795
    %v1406 = vpack.c.b16 %v806, %v796
    %v1407 = vpack.c.b16 %v807, %v797
    %v1408 = vpack.c.b16 %v808, %v798
    %v1409 = vpack.c.b16 %v809, %v799
    %v1410 = vpack.c.b16 %v810, %v800
    %v1411 = vpack.c.b16 %v811, %v801
    %v1412 = vpack.c.b16 %v822, %v812
    %v1413 = vpack.c.b16 %v823, %v813
    %v1414 = vpack.c.b16 %v824, %v814
    %v1415 = vpack.c.b16 %v825, %v815
    %v1416 = vpack.c.b16 %v826, %v816
    %v1417 = vpack.c.b16 %v827, %v817
    %v1418 = vpack.c.b16 %v828, %v818
    %v1419 = vpack.c.b16 %v829, %v819
    %v1420 = vpack.c.b16 %v830, %v820
    %v1421 = vpack.c.b16 %v831, %v821
    %v1422 = vpack.c.b16 %v842, %v832
    %v1423 = vpack.c.b16 %v843, %v833
    %v1424 = vpack.c.b16 %v844, %v834
    %v1425 = vpack.c.b16 %v845, %v835
    %v1426 = vpack.c.b16 %v846, %v836
    %v1427 = vpack.c.b16 %v847, %v837
    %v1428 = vpack.c.b16 %v848, %v838
    %v1429 = vpack.c.b16 %v849, %v839
    %v1430 = vpack.c.b16 %v850, %v840
    %v1431 = vpack.c.b16 %v851, %v841
    %v1432 = vpack.c.b16 %v862, %v852
    %v1433 = vpack.c.b16 %v863, %v853
    %v1434 = vpack.c.b16 %v864, %v854
    %v1435 = vpack.c.b16 %v865, %v855
    %v1436 = vpack.c.b16 %v866, %v856
    %v1437 = vpack.c.b16 %v867, %v857
    %v1438 = vpack.c.b16 %v868, %v858
    %v1439 = vpack.c.b16 %v869, %v859
    %v1440 = vpack.c.b16 %v870, %v860
    %v1441 = vpack.c.b16 %v871, %v861
    %v1442 = vpack.c.b16 %v882, %v872
    %v1443 = vpack.c.b16 %v883, %v873
    %v1444 = vpack.c.b16 %v884, %v874
    %v1445 = vpack.c.b16 %v885, %v875
    %v1446 = vpack.c.b16 %v886, %v876
    %v1447 = vpack.c.b16 %v887, %v877
    %v1448 = vpack.c.b16 %v888, %v878
    %v1449 = vpack.c.b16 %v889, %v879
    %v1450 = vpack.c.b16 %v890, %v880
    %v1451 = vpack.c.b16 %v891, %v881
    %v1452 = vpack.c.b16 %v902, %v892
    %v1453 = vpack.c.b16 %v903, %v893
    %v1454 = vpack.c.b16 %v904, %v894
    %v1455 = vpack.c.b16 %v905, %v895
    %v1456 = vpack.c.b16 %v906, %v896
    %v1457 = vpack.c.b16 %v907, %v897
    %v1458 = vpack.c.b16 %v908, %v898
    %v1459 = vpack.c.b16 %v909, %v899
    %v1460 = vpack.c.b16 %v910, %v900
    %v1461 = vpack.c.b16 %v911, %v901
    %v1462 = vpack.c.b16 %v922, %v912
    %v1463 = vpack.c.b16 %v923, %v913
    %v1464 = vpack.c.b16 %v924, %v914
    %v1465 = vpack.c.b16 %v925, %v915
    %v1466 = vpack.c.b16 %v926, %v916
    %v1467 = vpack.c.b16 %v927, %v917
    %v1468 = vpack.c.b16 %v928, %v918
    %v1469 = vpack.c.b16 %v929, %v919
    %v1470 = vpack.c.b16 %v930, %v920
    %v1471 = vpack.c.b16 %v931, %v921
    %v1472 = vpack.c.b16 %v942, %v932
    %v1473 = vpack.c.b16 %v943, %v933
    %v1474 = vpack.c.b16 %v944, %v934
    %v1475 = vpack.c.b16 %v945, %v935
    %v1476 = vpack.c.b16 %v946, %v936
    %v1477 = vpack.c.b16 %v947, %v937
    %v1478 = vpack.c.b16 %v948, %v938
    %v1479 = vpack.c.b16 %v949, %v939
    %v1480 = vpack.c.b16 %v950, %v940
    %v1481 = vpack.c.b16 %v951, %v941
    %v1482 = vpack.c.b16 %v962, %v952
    %v1483 = vpack.c.b16 %v963, %v953
    %v1484 = vpack.c.b16 %v964, %v954
    %v1485 = vpack.c.b16 %v965, %v955
    %v1486 = vpack.c.b16 %v966, %v956
    %v1487 = vpack.c.b16 %v967, %v957
    %v1488 = vpack.c.b16 %v968, %v958
    %v1489 = vpack.c.b16 %v969, %v959
    %v1490 = vpack.c.b16 %v970, %v960
    %v1491 = vpack.c.b16 %v971, %v961
    %v1492 = vpack.c.b16 %v982, %v972
    %v1493 = vpack.c.b16 %v983, %v973
    %v1494 = vpack.c.b16 %v984, %v974
    %v1495 = vpack.c.b16 %v985, %v975
    %v1496 = vpack.c.b16 %v986, %v976
    %v1497 = vpack.c.b16 %v987, %v977
    %v1498 = vpack.c.b16 %v988, %v978
    %v1499 = vpack.c.b16 %v989, %v979
    %v1500 = vpack.c.b16 %v990, %v980
    %v1501 = vpack.c.b16 %v991, %v981
    %v1502 = vpack.c.b16 %v1002, %v992
    %v1503 = vpack.c.b16 %v1003, %v993
    %v1504 = vpack.c.b16 %v1004, %v994
    %v1505 = vpack.c.b16 %v1005, %v995
    %v1506 = vpack.c.b16 %v1006, %v996
    %v1507 = vpack.c.b16 %v1007, %v997
    %v1508 = vpack.c.b16 %v1008, %v998
    %v1509 = vpack.c.b16 %v1009, %v999
    %v1510 = vpack.c.b16 %v1010, %v1000
    %v1511 = vpack.c.b16 %v1011, %v1001
    %v1512 = vpack.c.b16 %v1022, %v1012
    %v1513 = vpack.c.b16 %v1023, %v1013
    %v1514 = vpack.c.b16 %v1024, %v1014
    %v1515 = vpack.c.b16 %v1025, %v1015
    %v1516 = vpack.c.b16 %v1026, %v1016
    %v1517 = vpack.c.b16 %v1027, %v1017
    %v1518 = vpack.c.b16 %v1028, %v1018
    %v1519 = vpack.c.b16 %v1029, %v1019
    %v1520 = vpack.c.b16 %v1030, %v1020
    %v1521 = vpack.c.b16 %v1031, %v1021
    %v1522 = vpack.c.b16 %v1042, %v1032
    %v1523 = vpack.c.b16 %v1043, %v1033
    %v1524 = vpack.c.b16 %v1044, %v1034
    %v1525 = vpack.c.b16 %v1045, %v1035
    %v1526 = vpack.c.b16 %v1046, %v1036
    %v1527 = vpack.c.b16 %v1047, %v1037
    %v1528 = vpack.c.b16 %v1048, %v1038
    %v1529 = vpack.c.b16 %v1049, %v1039
    %v1530 = vpack.c.b16 %v1050, %v1040
    %v1531 = vpack.c.b16 %v1051, %v1041
    %v1532 = vpack.c.b16 %v1062, %v1052
    %v1533 = vpack.c.b16 %v1063, %v1053
    %v1534 = vpack.c.b16 %v1064, %v1054
    %v1535 = vpack.c.b16 %v1065, %v1055
    %v1536 = vpack.c.b16 %v1066, %v1056
    %v1537 = vpack.c.b16 %v1067, %v1057
    %v1538 = vpack.c.b16 %v1068, %v1058
    %v1539 = vpack.c.b16 %v1069, %v1059
    %v1540 = vpack.c.b16 %v1070, %v1060
    %v1541 = vpack.c.b16 %v1071, %v1061
    %v1542 = vpack.c.b16 %v1082, %v1072
    %v1543 = vpack.c.b16 %v1083, %v1073
    %v1544 = vpack.c.b16 %v1084, %v1074
    %v1545 = vpack.c.b16 %v1085, %v1075
    %v1546 = vpack.c.b16 %v1086, %v1076
    %v1547 = vpack.c.b16 %v1087, %v1077
    %v1548 = vpack.c.b16 %v1088, %v1078
    %v1549 = vpack.c.b16 %v1089, %v1079
    %v1550 = vpack.c.b16 %v1090, %v1080
    %v1551 = vpack.c.b16 %v1091, %v1081
    %v1552 = vpack.c.b16 %v1102, %v1092
    %v1553 = vpack.c.b16 %v1103, %v1093
    %v1554 = vpack.c.b16 %v1104, %v1094
    %v1555 = vpack.c.b16 %v1105, %v1095
    %v1556 = vpack.c.b16 %v1106, %v1096
    %v1557 = vpack.c.b16 %v1107, %v1097
    %v1558 = vpack.c.b16 %v1108, %v1098
    %v1559 = vpack.c.b16 %v1109, %v1099
    %v1560 = vpack.c.b16 %v1110, %v1100
    %v1561 = vpack.c.b16 %v1111, %v1101
    %v1562 = vpack.c.b16 %v1122, %v1112
    %v1563 = vpack.c.b16 %v1123, %v1113
    %v1564 = vpack.c.b16 %v1124, %v1114
    %v1565 = vpack.c.b16 %v1125, %v1115
    %v1566 = vpack.c.b16 %v1126, %v1116
    %v1567 = vpack.c.b16 %v1127, %v1117
    %v1568 = vpack.c.b16 %v1128, %v1118
    %v1569 = vpack.c.b16 %v1129, %v1119
    %v1570 = vpack.c.b16 %v1130, %v1120
    %v1571 = vpack.c.b16 %v1131, %v1121
    %v1572 = vpack.c.b16 %v1142, %v1132
    %v1573 = vpack.c.b16 %v1143, %v1133
    %v1574 = vpack.c.b16 %v1144, %v1134
    %v1575 = vpack.c.b16 %v1145, %v1135
    %v1576 = vpack.c.b16 %v1146, %v1136
    %v1577 = vpack.c.b16 %v1147, %v1137
    %v1578 = vpack.c.b16 %v1148, %v1138
    %v1579 = vpack.c.b16 %v1149, %v1139
    %v1580 = vpack.c.b16 %v1150, %v1140
    %v1581 = vpack.c.b16 %v1151, %v1141
    %v1582 = vpack.c.b16 %v1162, %v1152
    %v1583 = vpack.c.b16 %v1163, %v1153
    %v1584 = vpack.c.b16 %v1164, %v1154
    %v1585 = vpack.c.b16 %v1165, %v1155
    %v1586 = vpack.c.b16 %v1166, %v1156
    %v1587 = vpack.c.b16 %v1167, %v1157
    %v1588 = vpack.c.b16 %v1168, %v1158
    %v1589 = vpack.c.b16 %v1169, %v1159
    %v1590 = vpack.c.b16 %v1170, %v1160
    %v1591 = vpack.c.b16 %v1171, %v1161
    %v1592 = vpack.c.b16 %v1182, %v1172
    %v1593 = vpack.c.b16 %v1183, %v1173
    %v1594 = vpack.c.b16 %v1184, %v1174
    %v1595 = vpack.c.b16 %v1185, %v1175
    %v1596 = vpack.c.b16 %v1186, %v1176
    %v1597 = vpack.c.b16 %v1187, %v1177
    %v1598 = vpack.c.b16 %v1188, %v1178
    %v1599 = vpack.c.b16 %v1189, %v1179
    %v1600 = vpack.c.b16 %v1190, %v1180
    %v1601 = vpack.c.b16 %v1191, %v1181
    %v1602 = vpack.c.b16 %v1202, %v1192
    %v1603 = vpack.c.b16 %v1203, %v1193
    %v1604 = vpack.c.b16 %v1204, %v1194
    %v1605 = vpack.c.b16 %v1205, %v1195
    %v1606 = vpack.c.b16 %v1206, %v1196
    %v1607 = vpack.c.b16 %v1207, %v1197
    %v1608 = vpack.c.b16 %v1208, %v1198
    %v1609 = vpack.c.b16 %v1209, %v1199
    %v1610 = vpack.c.b16 %v1210, %v1200
    %v1611 = vpack.c.b16 %v1211, %v1201
    %v1612 = vpack.c.b16 %v1222, %v1212
    %v1613 = vpack.c.b16 %v1223, %v1213
    %v1614 = vpack.c.b16 %v1224, %v1214
    %v1615 = vpack.c.b16 %v1225, %v1215
    %v1616 = vpack.c.b16 %v1226, %v1216
    %v1617 = vpack.c.b16 %v1227, %v1217
    %v1618 = vpack.c.b16 %v1228, %v1218
    %v1619 = vpack.c.b16 %v1229, %v1219
    %v1620 = vpack.c.b16 %v1230, %v1220
    %v1621 = vpack.c.b16 %v1231, %v1221
    %v1622 = vpack.c.b16 %v1242, %v1232
    %v1623 = vpack.c.b16 %v1243, %v1233
    %v1624 = vpack.c.b16 %v1244, %v1234
    %v1625 = vpack.c.b16 %v1245, %v1235
    %v1626 = vpack.c.b16 %v1246, %v1236
    %v1627 = vpack.c.b16 %v1247, %v1237
    %v1628 = vpack.c.b16 %v1248, %v1238
    %v1629 = vpack.c.b16 %v1249, %v1239
    %v1630 = vpack.c.b16 %v1250, %v1240
    %v1631 = vpack.c.b16 %v1251, %v1241
    %v1632 = vpack.c.b16 %v1262, %v1252
    %v1633 = vpack.c.b16 %v1263, %v1253
    %v1634 = vpack.c.b16 %v1264, %v1254
    %v1635 = vpack.c.b16 %v1265, %v1255
    %v1636 = vpack.c.b16 %v1266, %v1256
    %v1637 = vpack.c.b16 %v1267, %v1257
    %v1638 = vpack.c.b16 %v1268, %v1258
    %v1639 = vpack.c.b16 %v1269, %v1259
    %v1640 = vpack.c.b16 %v1270, %v1260
    %v1641 = vpack.c.b16 %v1271, %v1261
    %v1642 = vpack.c.b16 %v1282, %v1272
    %v1643 = vpack.c.b16 %v1283, %v1273
    %v1644 = vpack.c.b16 %v1284, %v1274
    %v1645 = vpack.c.b16 %v1285, %v1275
    %v1646 = vpack.c.b16 %v1286, %v1276
    %v1647 = vpack.c.b16 %v1287, %v1277
    %v1648 = vpack.c.b16 %v1288, %v1278
    %v1649 = vpack.c.b16 %v1289, %v1279
    %v1650 = vpack.c.b16 %v1290, %v1280
    %v1651 = vpack.c.b16 %v1291, %v1281
    %v1652 = vpack.c.b16 %v1302, %v1292
    %v1653 = vpack.c.b16 %v1303, %v1293
    %v1654 = vpack.c.b16 %v1304, %v1294
    %v1655 = vpack.c.b16 %v1305, %v1295
    %v1656 = vpack.c.b16 %v1306, %v1296
    %v1657 = vpack.c.b16 %v1307, %v1297
    %v1658 = vpack.c.b16 %v1308, %v1298
    %v1659 = vpack.c.b16 %v1309, %v1299
    %v1660 = vpack.c.b16 %v1310, %v1300
    %v1661 = vpack.c.b16 %v1311, %v1301
    %v1662 = vpack.c.b16 %v1322, %v1312
    %v1663 = vpack.c.b16 %v1323, %v1313
    %v1664 = vpack.c.b16 %v1324, %v1314
    %v1665 = vpack.c.b16 %v1325, %v1315
    %v1666 = vpack.c.b16 %v1326, %v1316
    %v1667 = vpack.c.b16 %v1327, %v1317
    %v1668 = vpack.c.b16 %v1328, %v1318
    %v1669 = vpack.c.b16 %v1329, %v1319
    %v1670 = vpack.c.b16 %v1330, %v1320
    %v1671 = vpack.c.b16 %v1331, %v1321
    %v1672 = vpack.c.b16 %v1342, %v1332
    %v1673 = vpack.c.b16 %v1343, %v1333
    %v1674 = vpack.c.b16 %v1344, %v1334
    %v1675 = vpack.c.b16 %v1345, %v1335
    %v1676 = vpack.c.b16 %v1346, %v1336
    %v1677 = vpack.c.b16 %v1347, %v1337
    %v1678 = vpack.c.b16 %v1348, %v1338
    %v1679 = vpack.c.b16 %v1349, %v1339
    %v1680 = vpack.c.b16 %v1350, %v1340
    %v1681 = vpack.c.b16 %v1351, %v1341
    %v1682 = vpack.c.b16 %v1362, %v1352
    %v1683 = vpack.c.b16 %v1363, %v1353
    %v1684 = vpack.c.b16 %v1364, %v1354
    %v1685 = vpack.c.b16 %v1365, %v1355
    %v1686 = vpack.c.b16 %v1366, %v1356
    %v1687 = vpack.c.b16 %v1367, %v1357
    %v1688 = vpack.c.b16 %v1368, %v1358
    %v1689 = vpack.c.b16 %v1369, %v1359
    %v1690 = vpack.c.b16 %v1370, %v1360
    %v1691 = vpack.c.b16 %v1371, %v1361
    %2012 = vmatprep.subr.bf16.mxu0 %v1373
    %2013 = vmatpush1.bf16.msra.mxu0 %v1372
    %2014 = vmatprep.subr.bf16.mxu0 %v1383
    %2015 = vmatpush1.bf16.msra.mxu0 %v1382
    %2016 = vmatprep.subr.bf16.mxu0 %v1393
    %2017 = vmatpush1.bf16.msra.mxu0 %v1392
    %2018 = vmatprep.subr.bf16.mxu0 %v1403
    %2019 = vmatpush1.bf16.msra.mxu0 %v1402
    %2020 = vmatprep.subr.bf16.mxu0 %v1413
    %2021 = vmatpush1.bf16.msra.mxu0 %v1412
    %2022 = vmatprep.subr.bf16.mxu0 %v1423
    %2023 = vmatpush1.bf16.msra.mxu0 %v1422
    %2024 = vmatprep.subr.bf16.mxu0 %v1433
    %2025 = vmatpush1.bf16.msra.mxu0 %v1432
    %2026 = vmatprep.subr.bf16.mxu0 %v1443
    %2027 = vmatpush1.bf16.msra.mxu0 %v1442
    %2028 = vmatprep.subr.bf16.mxu0 %v1453
    %2029 = vmatpush1.bf16.msra.mxu0 %v1452
    %2030 = vmatprep.subr.bf16.mxu0 %v1463
    %2031 = vmatpush1.bf16.msra.mxu0 %v1462
    %2032 = vmatprep.subr.bf16.mxu0 %v1473
    %2033 = vmatpush1.bf16.msra.mxu0 %v1472
    %2034 = vmatprep.subr.bf16.mxu0 %v1483
    %2035 = vmatpush1.bf16.msra.mxu0 %v1482
    %2036 = vmatprep.subr.bf16.mxu0 %v1493
    %2037 = vmatpush1.bf16.msra.mxu0 %v1492
    %2038 = vmatprep.subr.bf16.mxu0 %v1503
    %2039 = vmatpush1.bf16.msra.mxu0 %v1502
    %2040 = vmatprep.subr.bf16.mxu0 %v1513
    %2041 = vmatpush1.bf16.msra.mxu0 %v1512
    %2042 = vmatprep.subr.bf16.mxu0 %v1523
    %2043 = vmatpush1.bf16.msra.mxu0 %v1522
    %2044 = vmatprep.mubr.bf16.mxu0 %v405
    %2045 = vmatmul.mubr.bf16.gmra.mrb[0].mxu0 %v404
    %v2046 = vpop.f32.mrb[0].mxu0
    %v2047 = vadd.f32 0.0, %v2046
    %v2048 = vpop.f32.mrb[0].mxu0
    %v2049 = vadd.f32 0.0, %v2048
    %v2050 = vpop.f32.mrb[0].mxu0
    %v2051 = vpop.f32.mrb[0].mxu0
    %2052 = vdwg.mxu0
    %2053 = vmatprep.subr.bf16.mxu0 %v1533
    %2054 = vmatpush1.bf16.msra.mxu0 %v1532
    %2055 = vmatprep.subr.bf16.mxu0 %v1543
    %2056 = vmatpush1.bf16.msra.mxu0 %v1542
    %2057 = vmatprep.subr.bf16.mxu0 %v1553
    %2058 = vmatpush1.bf16.msra.mxu0 %v1552
    %2059 = vmatprep.subr.bf16.mxu0 %v1563
    %2060 = vmatpush1.bf16.msra.mxu0 %v1562
    %2061 = vmatprep.subr.bf16.mxu0 %v1573
    %2062 = vmatpush1.bf16.msra.mxu0 %v1572
    %2063 = vmatprep.subr.bf16.mxu0 %v1583
    %2064 = vmatpush1.bf16.msra.mxu0 %v1582
    %2065 = vmatprep.subr.bf16.mxu0 %v1593
    %2066 = vmatpush1.bf16.msra.mxu0 %v1592
    %2067 = vmatprep.subr.bf16.mxu0 %v1603
    %2068 = vmatpush1.bf16.msra.mxu0 %v1602
    %2069 = vmatprep.subr.bf16.mxu0 %v1613
    %2070 = vmatpush1.bf16.msra.mxu0 %v1612
    %2071 = vmatprep.subr.bf16.mxu0 %v1623
    %2072 = vmatpush1.bf16.msra.mxu0 %v1622
    %2073 = vmatprep.subr.bf16.mxu0 %v1633
    %2074 = vmatpush1.bf16.msra.mxu0 %v1632
    %2075 = vmatprep.subr.bf16.mxu0 %v1643
    %2076 = vmatpush1.bf16.msra.mxu0 %v1642
    %2077 = vmatprep.subr.bf16.mxu0 %v1653
    %2078 = vmatpush1.bf16.msra.mxu0 %v1652
    %2079 = vmatprep.subr.bf16.mxu0 %v1663
    %2080 = vmatpush1.bf16.msra.mxu0 %v1662
    %2081 = vmatprep.subr.bf16.mxu0 %v1673
    %2082 = vmatpush1.bf16.msra.mxu0 %v1672
    %2083 = vmatprep.subr.bf16.mxu0 %v1683
    %2084 = vmatpush1.bf16.msra.mxu0 %v1682
    %2085 = vmatprep.mubr.bf16.mxu0 %v407
    %2086 = vmatmul.mubr.bf16.gmra.mrb[0].mxu0 %v406
    %v2087 = vpop.f32.mrb[0].mxu0
    %v2088 = vadd.f32 %v2047, %v2087
    %v2089 = vpop.f32.mrb[0].mxu0
    %v2090 = vadd.f32 %v2049, %v2089
    %v2091 = vpop.f32.mrb[0].mxu0
    %v2092 = vpop.f32.mrb[0].mxu0
    %2093 = vdwg.mxu0
    %2094 = vmatprep.subr.bf16.mxu0 %v1375
    %2095 = vmatpush1.bf16.msra.mxu0 %v1374
    %2096 = vmatprep.subr.bf16.mxu0 %v1385
    %2097 = vmatpush1.bf16.msra.mxu0 %v1384
    %2098 = vmatprep.subr.bf16.mxu0 %v1395
    %2099 = vmatpush1.bf16.msra.mxu0 %v1394
    %2100 = vmatprep.subr.bf16.mxu0 %v1405
    %2101 = vmatpush1.bf16.msra.mxu0 %v1404
    %2102 = vmatprep.subr.bf16.mxu0 %v1415
    %2103 = vmatpush1.bf16.msra.mxu0 %v1414
    %2104 = vmatprep.subr.bf16.mxu0 %v1425
    %2105 = vmatpush1.bf16.msra.mxu0 %v1424
    %2106 = vmatprep.subr.bf16.mxu0 %v1435
    %2107 = vmatpush1.bf16.msra.mxu0 %v1434
    %2108 = vmatprep.subr.bf16.mxu0 %v1445
    %2109 = vmatpush1.bf16.msra.mxu0 %v1444
    %2110 = vmatprep.subr.bf16.mxu0 %v1455
    %2111 = vmatpush1.bf16.msra.mxu0 %v1454
    %2112 = vmatprep.subr.bf16.mxu0 %v1465
    %2113 = vmatpush1.bf16.msra.mxu0 %v1464
    %2114 = vmatprep.subr.bf16.mxu0 %v1475
    %2115 = vmatpush1.bf16.msra.mxu0 %v1474
    %2116 = vmatprep.subr.bf16.mxu0 %v1485
    %2117 = vmatpush1.bf16.msra.mxu0 %v1484
    %2118 = vmatprep.subr.bf16.mxu0 %v1495
    %2119 = vmatpush1.bf16.msra.mxu0 %v1494
    %2120 = vmatprep.subr.bf16.mxu0 %v1505
    %2121 = vmatpush1.bf16.msra.mxu0 %v1504
    %2122 = vmatprep.subr.bf16.mxu0 %v1515
    %2123 = vmatpush1.bf16.msra.mxu0 %v1514
    %2124 = vmatprep.subr.bf16.mxu0 %v1525
    %2125 = vmatpush1.bf16.msra.mxu0 %v1524
    %2126 = vmatprep.mubr.bf16.mxu0 %v405
    %2127 = vmatmul.mubr.bf16.gmra.mrb[0].mxu0 %v404
    %v2128 = vpop.f32.mrb[0].mxu0
    %v2129 = vadd.f32 0.0, %v2128
    %v2130 = vpop.f32.mrb[0].mxu0
    %v2131 = vadd.f32 0.0, %v2130
    %v2132 = vpop.f32.mrb[0].mxu0
    %v2133 = vpop.f32.mrb[0].mxu0
    %2134 = vdwg.mxu0
    %2135 = vmatprep.subr.bf16.mxu0 %v1535
    %2136 = vmatpush1.bf16.msra.mxu0 %v1534
    %2137 = vmatprep.subr.bf16.mxu0 %v1545
    %2138 = vmatpush1.bf16.msra.mxu0 %v1544
    %2139 = vmatprep.subr.bf16.mxu0 %v1555
    %2140 = vmatpush1.bf16.msra.mxu0 %v1554
    %2141 = vmatprep.subr.bf16.mxu0 %v1565
    %2142 = vmatpush1.bf16.msra.mxu0 %v1564
    %2143 = vmatprep.subr.bf16.mxu0 %v1575
    %2144 = vmatpush1.bf16.msra.mxu0 %v1574
    %2145 = vmatprep.subr.bf16.mxu0 %v1585
    %2146 = vmatpush1.bf16.msra.mxu0 %v1584
    %2147 = vmatprep.subr.bf16.mxu0 %v1595
    %2148 = vmatpush1.bf16.msra.mxu0 %v1594
    %2149 = vmatprep.subr.bf16.mxu0 %v1605
    %2150 = vmatpush1.bf16.msra.mxu0 %v1604
    %2151 = vmatprep.subr.bf16.mxu0 %v1615
    %2152 = vmatpush1.bf16.msra.mxu0 %v1614
    %2153 = vmatprep.subr.bf16.mxu0 %v1625
    %2154 = vmatpush1.bf16.msra.mxu0 %v1624
    %2155 = vmatprep.subr.bf16.mxu0 %v1635
    %2156 = vmatpush1.bf16.msra.mxu0 %v1634
    %2157 = vmatprep.subr.bf16.mxu0 %v1645
    %2158 = vmatpush1.bf16.msra.mxu0 %v1644
    %2159 = vmatprep.subr.bf16.mxu0 %v1655
    %2160 = vmatpush1.bf16.msra.mxu0 %v1654
    %2161 = vmatprep.subr.bf16.mxu0 %v1665
    %2162 = vmatpush1.bf16.msra.mxu0 %v1664
    %2163 = vmatprep.subr.bf16.mxu0 %v1675
    %2164 = vmatpush1.bf16.msra.mxu0 %v1674
    %2165 = vmatprep.subr.bf16.mxu0 %v1685
    %2166 = vmatpush1.bf16.msra.mxu0 %v1684
    %2167 = vmatprep.mubr.bf16.mxu0 %v407
    %2168 = vmatmul.mubr.bf16.gmra.mrb[0].mxu0 %v406
    %v2169 = vpop.f32.mrb[0].mxu0
    %v2170 = vadd.f32 %v2129, %v2169
    %v2171 = vpop.f32.mrb[0].mxu0
    %v2172 = vadd.f32 %v2131, %v2171
    %v2173 = vpop.f32.mrb[0].mxu0
    %v2174 = vpop.f32.mrb[0].mxu0
    %2175 = vdwg.mxu0
    %2176 = vmatprep.subr.bf16.mxu0 %v1377
    %2177 = vmatpush1.bf16.msra.mxu0 %v1376
    %2178 = vmatprep.subr.bf16.mxu0 %v1387
    %2179 = vmatpush1.bf16.msra.mxu0 %v1386
    %2180 = vmatprep.subr.bf16.mxu0 %v1397
    %2181 = vmatpush1.bf16.msra.mxu0 %v1396
    %2182 = vmatprep.subr.bf16.mxu0 %v1407
    %2183 = vmatpush1.bf16.msra.mxu0 %v1406
    %2184 = vmatprep.subr.bf16.mxu0 %v1417
    %2185 = vmatpush1.bf16.msra.mxu0 %v1416
    %2186 = vmatprep.subr.bf16.mxu0 %v1427
    %2187 = vmatpush1.bf16.msra.mxu0 %v1426
    %2188 = vmatprep.subr.bf16.mxu0 %v1437
    %2189 = vmatpush1.bf16.msra.mxu0 %v1436
    %2190 = vmatprep.subr.bf16.mxu0 %v1447
    %2191 = vmatpush1.bf16.msra.mxu0 %v1446
    %2192 = vmatprep.subr.bf16.mxu0 %v1457
    %2193 = vmatpush1.bf16.msra.mxu0 %v1456
    %2194 = vmatprep.subr.bf16.mxu0 %v1467
    %2195 = vmatpush1.bf16.msra.mxu0 %v1466
    %2196 = vmatprep.subr.bf16.mxu0 %v1477
    %2197 = vmatpush1.bf16.msra.mxu0 %v1476
    %2198 = vmatprep.subr.bf16.mxu0 %v1487
    %2199 = vmatpush1.bf16.msra.mxu0 %v1486
    %2200 = vmatprep.subr.bf16.mxu0 %v1497
    %2201 = vmatpush1.bf16.msra.mxu0 %v1496
    %2202 = vmatprep.subr.bf16.mxu0 %v1507
    %2203 = vmatpush1.bf16.msra.mxu0 %v1506
    %2204 = vmatprep.subr.bf16.mxu0 %v1517
    %2205 = vmatpush1.bf16.msra.mxu0 %v1516
    %2206 = vmatprep.subr.bf16.mxu0 %v1527
    %2207 = vmatpush1.bf16.msra.mxu0 %v1526
    %2208 = vmatprep.mubr.bf16.mxu0 %v405
    %2209 = vmatmul.mubr.bf16.gmra.mrb[0].mxu0 %v404
    %v2210 = vpop.f32.mrb[0].mxu0
    %v2211 = vadd.f32 0.0, %v2210
    %v2212 = vpop.f32.mrb[0].mxu0
    %v2213 = vadd.f32 0.0, %v2212
    %v2214 = vpop.f32.mrb[0].mxu0
    %v2215 = vpop.f32.mrb[0].mxu0
    %2216 = vdwg.mxu0
    %2217 = vmatprep.subr.bf16.mxu0 %v1537
    %2218 = vmatpush1.bf16.msra.mxu0 %v1536
    %2219 = vmatprep.subr.bf16.mxu0 %v1547
    %2220 = vmatpush1.bf16.msra.mxu0 %v1546
    %2221 = vmatprep.subr.bf16.mxu0 %v1557
    %2222 = vmatpush1.bf16.msra.mxu0 %v1556
    %2223 = vmatprep.subr.bf16.mxu0 %v1567
    %2224 = vmatpush1.bf16.msra.mxu0 %v1566
    %2225 = vmatprep.subr.bf16.mxu0 %v1577
    %2226 = vmatpush1.bf16.msra.mxu0 %v1576
    %2227 = vmatprep.subr.bf16.mxu0 %v1587
    %2228 = vmatpush1.bf16.msra.mxu0 %v1586
    %2229 = vmatprep.subr.bf16.mxu0 %v1597
    %2230 = vmatpush1.bf16.msra.mxu0 %v1596
    %2231 = vmatprep.subr.bf16.mxu0 %v1607
    %2232 = vmatpush1.bf16.msra.mxu0 %v1606
    %2233 = vmatprep.subr.bf16.mxu0 %v1617
    %2234 = vmatpush1.bf16.msra.mxu0 %v1616
    %2235 = vmatprep.subr.bf16.mxu0 %v1627
    %2236 = vmatpush1.bf16.msra.mxu0 %v1626
    %2237 = vmatprep.subr.bf16.mxu0 %v1637
    %2238 = vmatpush1.bf16.msra.mxu0 %v1636
    %2239 = vmatprep.subr.bf16.mxu0 %v1647
    %2240 = vmatpush1.bf16.msra.mxu0 %v1646
    %2241 = vmatprep.subr.bf16.mxu0 %v1657
    %2242 = vmatpush1.bf16.msra.mxu0 %v1656
    %2243 = vmatprep.subr.bf16.mxu0 %v1667
    %2244 = vmatpush1.bf16.msra.mxu0 %v1666
    %2245 = vmatprep.subr.bf16.mxu0 %v1677
    %2246 = vmatpush1.bf16.msra.mxu0 %v1676
    %2247 = vmatprep.subr.bf16.mxu0 %v1687
    %2248 = vmatpush1.bf16.msra.mxu0 %v1686
    %2249 = vmatprep.mubr.bf16.mxu0 %v407
    %2250 = vmatmul.mubr.bf16.gmra.mrb[0].mxu0 %v406
    %v2251 = vpop.f32.mrb[0].mxu0
    %v2252 = vadd.f32 %v2211, %v2251
    %v2253 = vpop.f32.mrb[0].mxu0
    %v2254 = vadd.f32 %v2213, %v2253
    %v2255 = vpop.f32.mrb[0].mxu0
    %v2256 = vpop.f32.mrb[0].mxu0
    %2257 = vdwg.mxu0
    %2258 = vmatprep.subr.bf16.mxu0 %v1379
    %2259 = vmatpush1.bf16.msra.mxu0 %v1378
    %2260 = vmatprep.subr.bf16.mxu0 %v1389
    %2261 = vmatpush1.bf16.msra.mxu0 %v1388
    %2262 = vmatprep.subr.bf16.mxu0 %v1399
    %2263 = vmatpush1.bf16.msra.mxu0 %v1398
    %2264 = vmatprep.subr.bf16.mxu0 %v1409
    %2265 = vmatpush1.bf16.msra.mxu0 %v1408
    %2266 = vmatprep.subr.bf16.mxu0 %v1419
    %2267 = vmatpush1.bf16.msra.mxu0 %v1418
    %2268 = vmatprep.subr.bf16.mxu0 %v1429
    %2269 = vmatpush1.bf16.msra.mxu0 %v1428
    %2270 = vmatprep.subr.bf16.mxu0 %v1439
    %2271 = vmatpush1.bf16.msra.mxu0 %v1438
    %2272 = vmatprep.subr.bf16.mxu0 %v1449
    %2273 = vmatpush1.bf16.msra.mxu0 %v1448
    %2274 = vmatprep.subr.bf16.mxu0 %v1459
    %2275 = vmatpush1.bf16.msra.mxu0 %v1458
    %2276 = vmatprep.subr.bf16.mxu0 %v1469
    %2277 = vmatpush1.bf16.msra.mxu0 %v1468
    %2278 = vmatprep.subr.bf16.mxu0 %v1479
    %2279 = vmatpush1.bf16.msra.mxu0 %v1478
    %2280 = vmatprep.subr.bf16.mxu0 %v1489
    %2281 = vmatpush1.bf16.msra.mxu0 %v1488
    %2282 = vmatprep.subr.bf16.mxu0 %v1499
    %2283 = vmatpush1.bf16.msra.mxu0 %v1498
    %2284 = vmatprep.subr.bf16.mxu0 %v1509
    %2285 = vmatpush1.bf16.msra.mxu0 %v1508
    %2286 = vmatprep.subr.bf16.mxu0 %v1519
    %2287 = vmatpush1.bf16.msra.mxu0 %v1518
    %2288 = vmatprep.subr.bf16.mxu0 %v1529
    %2289 = vmatpush1.bf16.msra.mxu0 %v1528
    %2290 = vmatprep.mubr.bf16.mxu0 %v405
    %2291 = vmatmul.mubr.bf16.gmra.mrb[0].mxu0 %v404
    %v2292 = vpop.f32.mrb[0].mxu0
    %v2293 = vadd.f32 0.0, %v2292
    %v2294 = vpop.f32.mrb[0].mxu0
    %v2295 = vadd.f32 0.0, %v2294
    %v2296 = vpop.f32.mrb[0].mxu0
    %v2297 = vpop.f32.mrb[0].mxu0
    %2298 = vdwg.mxu0
    %2299 = vmatprep.subr.bf16.mxu0 %v1539
    %2300 = vmatpush1.bf16.msra.mxu0 %v1538
    %2301 = vmatprep.subr.bf16.mxu0 %v1549
    %2302 = vmatpush1.bf16.msra.mxu0 %v1548
    %2303 = vmatprep.subr.bf16.mxu0 %v1559
    %2304 = vmatpush1.bf16.msra.mxu0 %v1558
    %2305 = vmatprep.subr.bf16.mxu0 %v1569
    %2306 = vmatpush1.bf16.msra.mxu0 %v1568
    %2307 = vmatprep.subr.bf16.mxu0 %v1579
    %2308 = vmatpush1.bf16.msra.mxu0 %v1578
    %2309 = vmatprep.subr.bf16.mxu0 %v1589
    %2310 = vmatpush1.bf16.msra.mxu0 %v1588
    %2311 = vmatprep.subr.bf16.mxu0 %v1599
    %2312 = vmatpush1.bf16.msra.mxu0 %v1598
    %2313 = vmatprep.subr.bf16.mxu0 %v1609
    %2314 = vmatpush1.bf16.msra.mxu0 %v1608
    %2315 = vmatprep.subr.bf16.mxu0 %v1619
    %2316 = vmatpush1.bf16.msra.mxu0 %v1618
    %2317 = vmatprep.subr.bf16.mxu0 %v1629
    %2318 = vmatpush1.bf16.msra.mxu0 %v1628
    %2319 = vmatprep.subr.bf16.mxu0 %v1639
    %2320 = vmatpush1.bf16.msra.mxu0 %v1638
    %2321 = vmatprep.subr.bf16.mxu0 %v1649
    %2322 = vmatpush1.bf16.msra.mxu0 %v1648
    %2323 = vmatprep.subr.bf16.mxu0 %v1659
    %2324 = vmatpush1.bf16.msra.mxu0 %v1658
    %2325 = vmatprep.subr.bf16.mxu0 %v1669
    %2326 = vmatpush1.bf16.msra.mxu0 %v1668
    %2327 = vmatprep.subr.bf16.mxu0 %v1679
    %2328 = vmatpush1.bf16.msra.mxu0 %v1678
    %2329 = vmatprep.subr.bf16.mxu0 %v1689
    %2330 = vmatpush1.bf16.msra.mxu0 %v1688
    %2331 = vmatprep.mubr.bf16.mxu0 %v407
    %2332 = vmatmul.mubr.bf16.gmra.mrb[0].mxu0 %v406
    %v2333 = vpop.f32.mrb[0].mxu0
    %v2334 = vadd.f32 %v2293, %v2333
    %v2335 = vpop.f32.mrb[0].mxu0
    %v2336 = vadd.f32 %v2295, %v2335
    %v2337 = vpop.f32.mrb[0].mxu0
    %v2338 = vpop.f32.mrb[0].mxu0
    %2339 = vdwg.mxu0
    %2340 = vmatprep.subr.bf16.mxu0 %v1381
    %2341 = vmatpush1.bf16.msra.mxu0 %v1380
    %2342 = vmatprep.subr.bf16.mxu0 %v1391
    %2343 = vmatpush1.bf16.msra.mxu0 %v1390
    %2344 = vmatprep.subr.bf16.mxu0 %v1401
    %2345 = vmatpush1.bf16.msra.mxu0 %v1400
    %2346 = vmatprep.subr.bf16.mxu0 %v1411
    %2347 = vmatpush1.bf16.msra.mxu0 %v1410
    %2348 = vmatprep.subr.bf16.mxu0 %v1421
    %2349 = vmatpush1.bf16.msra.mxu0 %v1420
    %2350 = vmatprep.subr.bf16.mxu0 %v1431
    %2351 = vmatpush1.bf16.msra.mxu0 %v1430
    %2352 = vmatprep.subr.bf16.mxu0 %v1441
    %2353 = vmatpush1.bf16.msra.mxu0 %v1440
    %2354 = vmatprep.subr.bf16.mxu0 %v1451
    %2355 = vmatpush1.bf16.msra.mxu0 %v1450
    %2356 = vmatprep.subr.bf16.mxu0 %v1461
    %2357 = vmatpush1.bf16.msra.mxu0 %v1460
    %2358 = vmatprep.subr.bf16.mxu0 %v1471
    %2359 = vmatpush1.bf16.msra.mxu0 %v1470
    %2360 = vmatprep.subr.bf16.mxu0 %v1481
    %2361 = vmatpush1.bf16.msra.mxu0 %v1480
    %2362 = vmatprep.subr.bf16.mxu0 %v1491
    %2363 = vmatpush1.bf16.msra.mxu0 %v1490
    %2364 = vmatprep.subr.bf16.mxu0 %v1501
    %2365 = vmatpush1.bf16.msra.mxu0 %v1500
    %2366 = vmatprep.subr.bf16.mxu0 %v1511
    %2367 = vmatpush1.bf16.msra.mxu0 %v1510
    %2368 = vmatprep.subr.bf16.mxu0 %v1521
    %2369 = vmatpush1.bf16.msra.mxu0 %v1520
    %2370 = vmatprep.subr.bf16.mxu0 %v1531
    %2371 = vmatpush1.bf16.msra.mxu0 %v1530
    %2372 = vmatprep.mubr.bf16.mxu0 %v405
    %2373 = vmatmul.mubr.bf16.gmra.mrb[0].mxu0 %v404
    %v2374 = vpop.f32.mrb[0].mxu0
    %v2375 = vadd.f32 0.0, %v2374
    %v2376 = vpop.f32.mrb[0].mxu0
    %v2377 = vadd.f32 0.0, %v2376
    %v2378 = vpop.f32.mrb[0].mxu0
    %v2379 = vpop.f32.mrb[0].mxu0
    %2380 = vdwg.mxu0
    %2381 = vmatprep.subr.bf16.mxu0 %v1541
    %2382 = vmatpush1.bf16.msra.mxu0 %v1540
    %2383 = vmatprep.subr.bf16.mxu0 %v1551
    %2384 = vmatpush1.bf16.msra.mxu0 %v1550
    %2385 = vmatprep.subr.bf16.mxu0 %v1561
    %2386 = vmatpush1.bf16.msra.mxu0 %v1560
    %2387 = vmatprep.subr.bf16.mxu0 %v1571
    %2388 = vmatpush1.bf16.msra.mxu0 %v1570
    %2389 = vmatprep.subr.bf16.mxu0 %v1581
    %2390 = vmatpush1.bf16.msra.mxu0 %v1580
    %2391 = vmatprep.subr.bf16.mxu0 %v1591
    %2392 = vmatpush1.bf16.msra.mxu0 %v1590
    %2393 = vmatprep.subr.bf16.mxu0 %v1601
    %2394 = vmatpush1.bf16.msra.mxu0 %v1600
    %2395 = vmatprep.subr.bf16.mxu0 %v1611
    %2396 = vmatpush1.bf16.msra.mxu0 %v1610
    %2397 = vmatprep.subr.bf16.mxu0 %v1621
    %2398 = vmatpush1.bf16.msra.mxu0 %v1620
    %2399 = vmatprep.subr.bf16.mxu0 %v1631
    %2400 = vmatpush1.bf16.msra.mxu0 %v1630
    %2401 = vmatprep.subr.bf16.mxu0 %v1641
    %2402 = vmatpush1.bf16.msra.mxu0 %v1640
    %2403 = vmatprep.subr.bf16.mxu0 %v1651
    %2404 = vmatpush1.bf16.msra.mxu0 %v1650
    %2405 = vmatprep.subr.bf16.mxu0 %v1661
    %2406 = vmatpush1.bf16.msra.mxu0 %v1660
    %2407 = vmatprep.subr.bf16.mxu0 %v1671
    %2408 = vmatpush1.bf16.msra.mxu0 %v1670
    %2409 = vmatprep.subr.bf16.mxu0 %v1681
    %2410 = vmatpush1.bf16.msra.mxu0 %v1680
    %2411 = vmatprep.subr.bf16.mxu0 %v1691
    %2412 = vmatpush1.bf16.msra.mxu0 %v1690
    %2413 = vmatprep.mubr.bf16.mxu0 %v407
    %2414 = vmatmul.mubr.bf16.gmra.mrb[0].mxu0 %v406
    %v2415 = vpop.f32.mrb[0].mxu0
    %v2416 = vadd.f32 %v2375, %v2415
    %v2417 = vpop.f32.mrb[0].mxu0
    %v2418 = vadd.f32 %v2377, %v2417
    %v2419 = vpop.f32.mrb[0].mxu0
    %v2420 = vpop.f32.mrb[0].mxu0
    %2421 = vdwg.mxu0
    %v2422 = vadd.f32 %v66, %v2088
    %v2423 = vadd.f32 %v67, %v2090
    %v2424 = vadd.f32 %v68, %v2170
    %v2425 = vadd.f32 %v69, %v2172
    %v2426 = vadd.f32 %v70, %v2252
    %v2427 = vadd.f32 %v71, %v2254
    %v2428 = vadd.f32 %v72, %v2334
    %v2429 = vadd.f32 %v73, %v2336
    %v2430 = vadd.f32 %v74, %v2416
    %v2431 = vadd.f32 %v75, %v2418
    %2432 = vst [vmem:[#allocation2] sm:$0xff] %v2422
    %2433 = vst [vmem:[#allocation2 + $0x8] sm:$0xff] %v2423
    %2434 = vst [vmem:[#allocation2 + $0x10] sm:$0xff] %v2424
    %2435 = vst [vmem:[#allocation2 + $0x18] sm:$0xff] %v2425
    %2436 = vst [vmem:[#allocation2 + $0x20] sm:$0xff] %v2426
    %2437 = vst [vmem:[#allocation2 + $0x28] sm:$0xff] %v2427
    %2438 = vst [vmem:[#allocation2 + $0x30] sm:$0xff] %v2428
    %2439 = vst [vmem:[#allocation2 + $0x38] sm:$0xff] %v2429
    %2440 = vst [vmem:[#allocation2 + $0x40] sm:$0xff] %v2430
    %2441 = vst [vmem:[#allocation2 + $0x48] sm:$0xff] %v2431
    // Predicated region
    $region30: #{tpu_custom_call.1} parent=1 // pred_check
      %p2442 = pneg %p52
    $region31: #{tpu_custom_call.1} parent=1 // pred_check_branch
      %2444 = sbr.rel (%p2442) target = $region33
    $region32: #{tpu_custom_call.1} parent=1 // pred_region
      %v2445 = vld [vmem:[#allocation2] sm:$0xff]
      %v2446 = vld [vmem:[#allocation2 + $0x8] sm:$0xff]
      %v2447 = vld [vmem:[#allocation2 + $0x10] sm:$0xff]
      %v2448 = vld [vmem:[#allocation2 + $0x18] sm:$0xff]
      %v2449 = vld [vmem:[#allocation2 + $0x20] sm:$0xff]
      %v2450 = vld [vmem:[#allocation2 + $0x28] sm:$0xff]
      %v2451 = vld [vmem:[#allocation2 + $0x30] sm:$0xff]
      %v2452 = vld [vmem:[#allocation2 + $0x38] sm:$0xff]
      %v2453 = vld [vmem:[#allocation2 + $0x40] sm:$0xff]
      %v2454 = vld [vmem:[#allocation2 + $0x48] sm:$0xff]
      %v2455 = vld [vmem:[#allocation8] sm:$0xff]
      %v2456 = vld [vmem:[#allocation8 + $0x8] sm:$0x3]
      %v2459 = vlaneseq
      %v2460 = vshrl.u32 %v2459, 7
      %v2461 = vsub.s32 0, %v2460
      %v2462 = vrot.slane %v2455, %v2461
      %v2463 = vlaneseq
      %v2464 = vshrl.u32 %v2463, 7
      %v2465 = vsub.s32 1, %v2464
      %v2466 = vrot.slane %v2455, %v2465
      %v2467 = vlaneseq
      %v2468 = vshrl.u32 %v2467, 7
      %v2469 = vsub.s32 2, %v2468
      %v2470 = vrot.slane %v2455, %v2469
      %v2471 = vlaneseq
      %v2472 = vshrl.u32 %v2471, 7
      %v2473 = vsub.s32 3, %v2472
      %v2474 = vrot.slane %v2455, %v2473
      %v2475 = vlaneseq
      %v2476 = vshrl.u32 %v2475, 7
      %v2477 = vsub.s32 4, %v2476
      %v2478 = vrot.slane %v2455, %v2477
      %v2479 = vlaneseq
      %v2480 = vshrl.u32 %v2479, 7
      %v2481 = vsub.s32 5, %v2480
      %v2482 = vrot.slane %v2455, %v2481
      %v2483 = vlaneseq
      %v2484 = vshrl.u32 %v2483, 7
      %v2485 = vsub.s32 6, %v2484
      %v2486 = vrot.slane %v2455, %v2485
      %v2487 = vlaneseq
      %v2488 = vshrl.u32 %v2487, 7
      %v2489 = vsub.s32 7, %v2488
      %v2490 = vrot.slane %v2455, %v2489
      %v2491 = vlaneseq
      %v2492 = vshrl.u32 %v2491, 7
      %v2493 = vsub.s32 0, %v2492
      %v2494 = vrot.slane %v2456, %v2493
      %v2495 = vlaneseq
      %v2496 = vshrl.u32 %v2495, 7
      %v2497 = vsub.s32 1, %v2496
      %v2498 = vrot.slane %v2456, %v2497
      %v2509 = vadd.f32 %v2445, %v2462
      %v2510 = vadd.f32 %v2446, %v2466
      %v2511 = vadd.f32 %v2447, %v2470
      %v2512 = vadd.f32 %v2448, %v2474
      %v2513 = vadd.f32 %v2449, %v2478
      %v2514 = vadd.f32 %v2450, %v2482
      %v2515 = vadd.f32 %v2451, %v2486
      %v2516 = vadd.f32 %v2452, %v2490
      %v2517 = vadd.f32 %v2453, %v2494
      %v2518 = vadd.f32 %v2454, %v2498
      %2519 = vst [vmem:[#allocation9] sm:$0xff] %v2509
      %2520 = vst [vmem:[#allocation9 + $0x8] sm:$0xff] %v2510
      %2521 = vst [vmem:[#allocation9 + $0x10] sm:$0xff] %v2511
      %2522 = vst [vmem:[#allocation9 + $0x18] sm:$0xff] %v2512
      %2523 = vst [vmem:[#allocation9 + $0x20] sm:$0xff] %v2513
      %2524 = vst [vmem:[#allocation9 + $0x28] sm:$0xff] %v2514
      %2525 = vst [vmem:[#allocation9 + $0x30] sm:$0xff] %v2515
      %2526 = vst [vmem:[#allocation9 + $0x38] sm:$0xff] %v2516
      %2527 = vst [vmem:[#allocation9 + $0x40] sm:$0xff] %v2517
      %2528 = vst [vmem:[#allocation9 + $0x48] sm:$0xff] %v2518
    $region33: #{tpu_custom_call.1} parent=1 // pred_fallthru
      _
    // Predicated region
    $region34: #{tpu_custom_call.1} parent=1 // pred_check
      _
    $region35: #{tpu_custom_call.1} parent=1 // pred_check_branch
      %2530 = sbr.rel (0) target = $region37
    $region36: #{tpu_custom_call.1} parent=1 // pred_region
      %s2532 = ssub.s32 1280, 1280
      %2533 = vsyncadd [#allocation5], %s2532
      %s2535 = sshll.u32 [#allocation9], 4
      %s2536 = int_to_ptr.vmem [resolvable:$true] %s2535
      %2538 = dma.vmem_to_hbm [thread:$0]  %s2536, 1280, %s3, [#allocation5]
    $region37: #{tpu_custom_call.1} parent=1 // pred_fallthru
      _
    // Predicated region
    $region38: #{tpu_custom_call.1} parent=1 // pred_check
      _
    $region39: #{tpu_custom_call.1} parent=1 // pred_check_branch
      %2540 = sbr.rel (0) target = $region41
    $region40: #{tpu_custom_call.1} parent=1 // pred_region
      %2541 = dma.done [#allocation5], 1280
    $region41: #{tpu_custom_call.1} parent=1 // pred_fallthru
      _
    %2542 = vsyncpa [#allocation4], 1
    %2543 = vsyncpa [#allocation7], 1
    %2544 = vsyncpa [#allocation5], 1

</llo_original>
